<compile_context>
chip_gen: v5e
topology: v5e:2x2
jax: 0.10.0
libtpu: 0.0.40
codegen_flags: <defaults>
</compile_context>

<pallas_src>
import functools
import math

import numpy as np
import jax
import jax.numpy as jnp
from jax.experimental import pallas as pl
from jax.experimental.pallas import tpu as pltpu

EPS = 1e-12  # BSARec LayerNorm eps


def _layer_norm(x, w, b):
  # BSARec custom LayerNorm: biased variance over the last axis.
  u = jnp.mean(x, axis=-1, keepdims=True)
  d = x - u
  s = jnp.mean(d * d, axis=-1, keepdims=True)
  return w * (d * jax.lax.rsqrt(s + EPS)) + b


def _bsarec_block_kernel(*args, num_heads, head_dim, alpha, mxu_dtype,
                         builtin_causal_mask):
  it = iter(args)
  x_ref = next(it)
  mask_ref = None if builtin_causal_mask else next(it)
  (f_fwd_ref, f_inv_ref, cpx_ref, clo_ref, ln1_w_ref, ln1_b_ref,
   wqkv_ref, bqkv_ref, wo_ref, bo_ref, ln2_w_ref, ln2_b_ref,
   w1_ref, b1_ref, w2_ref, b2_ref, ln3_w_ref, ln3_b_ref, out_ref) = it

  bt, seq, hidden = x_ref.shape
  m = bt * seq                         # batch folded into the matmul M dimension
  f32 = jnp.float32

  x3 = x_ref[...]                      # (Bt, S, H) f32
  xf = x3.reshape(m, hidden)           # (M, H)
  xm = xf.astype(mxu_dtype)            # MXU-input copy (bf16 in the perf config)

  # ---------------- FrequencyLayer (dsp branch), kept in f32 (tiny FLOPs) ----
  # low = F^T (F x) along seq: rank-R factorization of ortho rfft->trunc->irfft.
  # Only the small (R,S)/(S,R) factors are broadcast over the batch; x is never
  # replicated.
  f_fwd = jnp.broadcast_to(f_fwd_ref[...][None], (bt,) + f_fwd_ref.shape)
  f_inv = jnp.broadcast_to(f_inv_ref[...][None], (bt,) + f_inv_ref.shape)
  bdims = (((2,), (1,)), ((0,), (0,)))
  t = jax.lax.dot_general(f_fwd, x3, bdims, preferred_element_type=f32)    # (Bt,R,H)
  low = jax.lax.dot_general(f_inv, t, bdims, preferred_element_type=f32)   # (Bt,S,H)
  low = low.reshape(m, hidden)
  # seq_fft + x == (1+beta^2)*x + (1-beta^2)*low   ("high" never materialized)
  dsp = _layer_norm(cpx_ref[...] * xf + clo_ref[...] * low,
                    ln1_w_ref[...], ln1_b_ref[...])                        # (M, H)

  # ---------------- MultiHeadAttention (gsp branch) ----------------
  # One full-width QKV projection: (M,H) @ (H,3H), N = 3H lane-dense.
  qkv = jnp.dot(xm, wqkv_ref[...], preferred_element_type=f32) + bqkv_ref[...]
  q = qkv[:, :hidden].reshape(bt, seq, hidden)
  k = qkv[:, hidden:2 * hidden].reshape(bt, seq, hidden)
  v = qkv[:, 2 * hidden:].reshape(bt, seq, hidden)

  if mask_ref is not None:
    amask = mask_ref[...]                                                  # (Bt,S,S)
  else:
    row = jax.lax.broadcasted_iota(jnp.int32, (seq, seq), 0)
    col = jax.lax.broadcasted_iota(jnp.int32, (seq, seq), 1)
    amask = jnp.where(col <= row, 0.0, -10000.0).astype(f32)
    amask = jnp.broadcast_to(amask[None], (bt, seq, seq))  # hoisted (not per head)

  inv_scale = 1.0 / math.sqrt(head_dim)
  ctx_heads = []
  # Heads are static lane slices; loop unrolls num_heads times with the batch
  # tile as the only dot_general batch dim (no head broadcast, no VMEM scratch).
  for h in range(num_heads):
    sl = slice(h * head_dim, (h + 1) * head_dim)
    qh = q[:, :, sl].astype(mxu_dtype)
    kh = k[:, :, sl].astype(mxu_dtype)
    vh = v[:, :, sl].astype(mxu_dtype)
    sc = jax.lax.dot_general(qh, kh, (((2,), (2,)), ((0,), (0,))),
                             preferred_element_type=f32)                   # (Bt,S,S)
    sc = sc * inv_scale + amask
    sc = sc - jnp.max(sc, axis=-1, keepdims=True)
    e = jnp.exp(sc)
    denom = jnp.sum(e, axis=-1, keepdims=True)
    p = e * pl.reciprocal(denom, approx=False)      # exact reciprocal (review fix)
    ctx_heads.append(
        jax.lax.dot_general(p.astype(mxu_dtype), vh,
                            (((2,), (1,)), ((0,), (0,))),
                            preferred_element_type=f32))                   # (Bt,S,hd)

  ctx = jnp.concatenate(ctx_heads, axis=-1).reshape(m, hidden)             # (M, H)
  # Head merge folded into one full-width output projection (K = H on the MXU).
  attn = jnp.dot(ctx.astype(mxu_dtype), wo_ref[...],
                 preferred_element_type=f32) + bo_ref[...]
  gsp = _layer_norm(attn + xf, ln2_w_ref[...], ln2_b_ref[...])

  # ---------------- BSARecLayer mix + FeedForward ----------------
  mixed = alpha * dsp + (1.0 - alpha) * gsp
  h1 = jnp.dot(mixed.astype(mxu_dtype), w1_ref[...],
               preferred_element_type=f32) + b1_ref[...]
  h1 = jnp.maximum(h1, 0.0)       # args.hidden_act == "relu"
  # TODO(synk): the erf-based "gelu" ACT2FN entry would need an erf lowering here.
  h2 = jnp.dot(h1.astype(mxu_dtype), w2_ref[...],
               preferred_element_type=f32) + b2_ref[...]
  out = _layer_norm(h2 + mixed, ln3_w_ref[...], ln3_b_ref[...])
  out_ref[...] = out.reshape(bt, seq, hidden).astype(out_ref.dtype)


def low_pass_factors(seq_len, c, dtype=np.float32):
  """Low-rank factors F (R,S), F^T (S,R) with F^T F == irfft(trunc_c(rfft(.)))
  along seq (norm='ortho').  All-zero sin rows (k=0, Nyquist) are dropped."""
  c_eff = min(c, seq_len // 2 + 1)
  n = np.arange(seq_len, dtype=np.float64)
  rows = []
  for k in range(c_eff):
    nyquist = (seq_len % 2 == 0) and (k == seq_len // 2)
    w = 1.0 if (k == 0 or nyquist) else 2.0
    ang = 2.0 * np.pi * k * n / seq_len
    rows.append(np.sqrt(w / seq_len) * np.cos(ang))
    rows.append(np.sqrt(w / seq_len) * np.sin(ang))
  f = np.stack(rows, axis=0)
  f = f[np.abs(f).max(axis=1) > 1e-12]              # drop dead (all-zero) rows
  r_pad = max(8, ((f.shape[0] + 7) // 8) * 8)       # sublane-align, zero-padded
  f_pad = np.zeros((r_pad, seq_len), dtype)
  f_pad[: f.shape[0]] = f.astype(dtype)
  return jnp.asarray(f_pad), jnp.asarray(np.ascontiguousarray(f_pad.T))


def _default_batch_tile(batch, seq, hidden, inner):
  # Rough per-batch-element live f32 footprint (activations + one (S,S) score
  # slab per unrolled head step); keep a tile well under v7x's 64 MiB VMEM.
  per_b = 4 * (seq * (14 * hidden + 2 * inner) + 2 * seq * seq)
  budget = 16 * 2 ** 20
  bt = max(1, min(batch, budget // max(per_b, 1)))
  if batch >= 2:
    bt = max(1, min(bt, batch // 2))  # >=2 grid steps: pipelining + v7x megacore
  while batch % bt:
    bt -= 1
  return bt


def _batch_spec(shape):
  return pl.BlockSpec(shape, lambda b, _n=len(shape): (b,) + (0,) * (_n - 1))


def _shared_spec(shape, single_buffer=False):
  idx = lambda b, _n=len(shape): (0,) * _n
  if single_buffer:
    # Constant-index weight blocks are fetched once; single-buffering halves
    # their VMEM footprint (enable when VMEM-bound, e.g. large H/inner on v7x).
    return pl.BlockSpec(shape, idx, pipeline_mode=pl.Buffered(1))
  return pl.BlockSpec(shape, idx)


def bsarec_block(x, attention_mask, params, *, c, num_heads, alpha,
                 batch_tile=None, mxu_dtype=jnp.bfloat16,
                 builtin_causal_mask=False, single_buffer_weights=False):
  B, S, H = x.shape
  head_dim = H // num_heads
  inner = params["w1"].shape[1]
  bt = _default_batch_tile(B, S, H, inner) if batch_tile is None else batch_tile
  assert B % bt == 0, "batch must be divisible by batch_tile"

  f_fwd, f_inv = low_pass_factors(S, c)
  R = f_fwd.shape[0]

  beta_sq = (params["beta"].reshape(1, H).astype(jnp.float32)) ** 2
  c_plus = 1.0 + beta_sq          # (1+beta^2)
  c_low = 1.0 - beta_sq           # (1-beta^2)

  # Fused QKV weight (H, 3H); big weights stored in the MXU-input dtype.
  wqkv = jnp.concatenate([params["wq"], params["wk"], params["wv"]],
                         axis=1).astype(mxu_dtype)
  bqkv = jnp.concatenate([params["bq"], params["bk"], params["bv"]],
                         axis=1).astype(jnp.float32)
  wo = params["wo"].astype(mxu_dtype)
  w1 = params["w1"].astype(mxu_dtype)
  w2 = params["w2"].astype(mxu_dtype)

  operands = [x]
  in_specs = [_batch_spec((bt, S, H))]
  if not builtin_causal_mask:
    mask3 = attention_mask.reshape(B, S, S).astype(jnp.float32)
    operands.append(mask3)
    in_specs.append(_batch_spec((bt, S, S)))
  operands += [
      f_fwd, f_inv, c_plus, c_low, params["ln1_w"], params["ln1_b"],
      wqkv, bqkv, wo, params["bo"], params["ln2_w"], params["ln2_b"],
      w1, params["b1"], w2, params["b2"], params["ln3_w"], params["ln3_b"],
  ]
  shared_shapes = [(R, S), (S, R), (1, H), (1, H), (1, H), (1, H),
                   (H, 3 * H), (1, 3 * H), (H, H), (1, H), (1, H), (1, H),
                   (H, inner), (1, inner), (inner, H), (1, H), (1, H), (1, H)]
  in_specs += [_shared_spec(s, single_buffer_weights) for s in shared_shapes]

  # Explicit VMEM budget: double-buffered x/mask/out + weights + activations.
  wbytes = 2 if mxu_dtype == jnp.bfloat16 else 4
  est = (4 * bt * S * H * 4
         + (0 if builtin_causal_mask else 2 * bt * S * S * 4)
         + (H * 3 * H + H * H + 2 * H * inner) * wbytes
         + bt * S * (14 * H + 2 * inner) * 4 + 2 * bt * S * S * 4)
  vmem_limit = int(min(max(2 * est, 16 * 2 ** 20), 40 * 2 ** 20))

  kernel = functools.partial(
      _bsarec_block_kernel, num_heads=num_heads, head_dim=head_dim, alpha=alpha,
      mxu_dtype=mxu_dtype, builtin_causal_mask=builtin_causal_mask)

  return pl.pallas_call(
      kernel,
      out_shape=jax.ShapeDtypeStruct((B, S, H), x.dtype),
      grid=(B // bt,),
      in_specs=in_specs,
      out_specs=_batch_spec((bt, S, H)),
      compiler_params=pltpu.CompilerParams(
          dimension_semantics=("parallel",),      # batch tiles are independent
          vmem_limit_bytes=vmem_limit),
  )(*operands)


def reference(x, mask4, p, *, c, num_heads, alpha):
  """Pure-JAX reference of BSARecBlock.forward (eval mode), using real FFTs."""
  B, S, H = x.shape
  hd = H // num_heads

  def ln(v, w, b):
    u = v.mean(-1, keepdims=True)
    d = v - u
    s = (d * d).mean(-1, keepdims=True)
    return w * (d / jnp.sqrt(s + EPS)) + b

  xf = jnp.fft.rfft(x, axis=1, norm="ortho")
  keep = (jnp.arange(S // 2 + 1) < c)[None, :, None]
  low = jnp.fft.irfft(xf * keep, n=S, axis=1, norm="ortho")
  high = x - low
  dsp = ln(low + p["beta"] ** 2 * high + x, p["ln1_w"], p["ln1_b"])

  q = x @ p["wq"] + p["bq"]
  k = x @ p["wk"] + p["bk"]
  v = x @ p["wv"] + p["bv"]
  split = lambda t: t.reshape(B, S, num_heads, hd).transpose(0, 2, 1, 3)
  qh, kh, vh = split(q), split(k), split(v)
  sc = jnp.einsum("bhqd,bhkd->bhqk", qh, kh) / math.sqrt(hd) + mask4
  pr = jax.nn.softmax(sc, axis=-1)
  ctx = jnp.einsum("bhqk,bhkd->bhqd", pr, vh).transpose(0, 2, 1, 3).reshape(B, S, H)
  gsp = ln(ctx @ p["wo"] + p["bo"] + x, p["ln2_w"], p["ln2_b"])

  mixed = alpha * dsp + (1 - alpha) * gsp
  h1 = jnp.maximum(mixed @ p["w1"] + p["b1"], 0.0)
  h2 = h1 @ p["w2"] + p["b2"]
  return ln(h2 + mixed, p["ln3_w"], p["ln3_b"])


def init_params(key, H, inner):
  ks = jax.random.split(key, 13)
  rnd = lambda k, shape: 0.02 * jax.random.normal(k, shape, jnp.float32)
  return {
      "beta": jax.random.normal(ks[0], (1, 1, H), jnp.float32),   # torch.randn
      "wq": rnd(ks[1], (H, H)), "bq": rnd(ks[2], (1, H)),
      "wk": rnd(ks[3], (H, H)), "bk": rnd(ks[4], (1, H)),
      "wv": rnd(ks[5], (H, H)), "bv": rnd(ks[6], (1, H)),
      "wo": rnd(ks[7], (H, H)), "bo": rnd(ks[8], (1, H)),
      "w1": rnd(ks[9], (H, inner)), "b1": rnd(ks[10], (1, inner)),
      "w2": rnd(ks[11], (inner, H)), "b2": rnd(ks[12], (1, H)),
      "ln1_w": jnp.ones((1, H), jnp.float32), "ln1_b": jnp.zeros((1, H), jnp.float32),
      "ln2_w": jnp.ones((1, H), jnp.float32), "ln2_b": jnp.zeros((1, H), jnp.float32),
      "ln3_w": jnp.ones((1, H), jnp.float32), "ln3_b": jnp.zeros((1, H), jnp.float32),
  }


if __name__ == "__main__":
  # args: hidden_size=32, num_attention_heads=2, c=5 (kept freqs = 5//2+1 = 3),
  # alpha=0.7, hidden_act="relu", dropout probs irrelevant (eval mode).
  B, S, H = 2, 8, 32
  NUM_HEADS = 2
  INNER = 4 * H
  C = 5 // 2 + 1
  ALPHA = 0.7

  root = jax.random.PRNGKey(0)
  k_x, k_p = jax.random.split(root)
  x = jax.random.normal(k_x, (B, S, H), jnp.float32)
  params = init_params(k_p, H, INNER)

  # Standard SASRec-style additive causal mask (0 where allowed, -10000 masked).
  causal = jnp.tril(jnp.ones((S, S), jnp.float32))
  attention_mask = jnp.broadcast_to((1.0 - causal) * -10000.0, (B, 1, S, S))

  with jax.default_matmul_precision("highest"):   # accurate f32 reference
    ref = reference(x, attention_mask, params, c=C, num_heads=NUM_HEADS, alpha=ALPHA)
  ref = np.asarray(jax.block_until_ready(ref))

  # 1) f32 MXU path with the module's external attention mask (tight check).
  out_f32 = bsarec_block(x, attention_mask, params, c=C, num_heads=NUM_HEADS,
                         alpha=ALPHA, mxu_dtype=jnp.float32)
  out_f32 = jax.block_until_ready(out_f32)
  np.testing.assert_allclose(np.asarray(out_f32), ref, rtol=5e-3, atol=5e-3)

  # 2) Performance config: bf16 MXU inputs + in-kernel causal mask (no mask DMA).
  out_bf16 = bsarec_block(x, None, params, c=C, num_heads=NUM_HEADS,
                          alpha=ALPHA, mxu_dtype=jnp.bfloat16,
                          builtin_causal_mask=True)
  out_bf16 = jax.block_until_ready(out_bf16)
  np.testing.assert_allclose(np.asarray(out_bf16), ref, rtol=3e-2, atol=3e-2)

  print("KERNEL_OK")
</pallas_src>

<mosaic_0001>
module attributes {stable_mosaic.version = 11 : i64} {
  func.func @_bsarec_block_kernel(%arg0: i32, %arg1: memref<1x8x32xf32, #tpu.memory_space<vmem>>, %arg2: memref<1x8x8xf32, #tpu.memory_space<vmem>>, %arg3: memref<8x8xf32, #tpu.memory_space<vmem>>, %arg4: memref<8x8xf32, #tpu.memory_space<vmem>>, %arg5: memref<1x32xf32, #tpu.memory_space<vmem>>, %arg6: memref<1x32xf32, #tpu.memory_space<vmem>>, %arg7: memref<1x32xf32, #tpu.memory_space<vmem>>, %arg8: memref<1x32xf32, #tpu.memory_space<vmem>>, %arg9: memref<32x96xf32, #tpu.memory_space<vmem>>, %arg10: memref<1x96xf32, #tpu.memory_space<vmem>>, %arg11: memref<32x32xf32, #tpu.memory_space<vmem>>, %arg12: memref<1x32xf32, #tpu.memory_space<vmem>>, %arg13: memref<1x32xf32, #tpu.memory_space<vmem>>, %arg14: memref<1x32xf32, #tpu.memory_space<vmem>>, %arg15: memref<32x128xf32, #tpu.memory_space<vmem>>, %arg16: memref<1x128xf32, #tpu.memory_space<vmem>>, %arg17: memref<128x32xf32, #tpu.memory_space<vmem>>, %arg18: memref<1x32xf32, #tpu.memory_space<vmem>>, %arg19: memref<1x32xf32, #tpu.memory_space<vmem>>, %arg20: memref<1x32xf32, #tpu.memory_space<vmem>>, %arg21: memref<1x8x32xf32, #tpu.memory_space<vmem>>) attributes {dimension_semantics = [#tpu.dimension_semantics<parallel>], iteration_bounds = array<i64: 2>, scalar_prefetch = 0 : i64, scratch_operands = 0 : i64, tpu.core_type = #tpu.core_type<tc>, window_params = [{transform_indices = @transform_0, window_bounds = array<i64: 1, 8, 32>}, {transform_indices = @transform_1, window_bounds = array<i64: 1, 8, 8>}, {pipeline_mode = #tpu.pipeline_mode<synchronous>, transform_indices = @transform_2, window_bounds = array<i64: 8, 8>}, {pipeline_mode = #tpu.pipeline_mode<synchronous>, transform_indices = @transform_3, window_bounds = array<i64: 8, 8>}, {pipeline_mode = #tpu.pipeline_mode<synchronous>, transform_indices = @transform_4, window_bounds = array<i64: 1, 32>}, {pipeline_mode = #tpu.pipeline_mode<synchronous>, transform_indices = @transform_5, window_bounds = array<i64: 1, 32>}, {pipeline_mode = #tpu.pipeline_mode<synchronous>, transform_indices = @transform_6, window_bounds = array<i64: 1, 32>}, {pipeline_mode = #tpu.pipeline_mode<synchronous>, transform_indices = @transform_7, window_bounds = array<i64: 1, 32>}, {pipeline_mode = #tpu.pipeline_mode<synchronous>, transform_indices = @transform_8, window_bounds = array<i64: 32, 96>}, {pipeline_mode = #tpu.pipeline_mode<synchronous>, transform_indices = @transform_9, window_bounds = array<i64: 1, 96>}, {pipeline_mode = #tpu.pipeline_mode<synchronous>, transform_indices = @transform_10, window_bounds = array<i64: 32, 32>}, {pipeline_mode = #tpu.pipeline_mode<synchronous>, transform_indices = @transform_11, window_bounds = array<i64: 1, 32>}, {pipeline_mode = #tpu.pipeline_mode<synchronous>, transform_indices = @transform_12, window_bounds = array<i64: 1, 32>}, {pipeline_mode = #tpu.pipeline_mode<synchronous>, transform_indices = @transform_13, window_bounds = array<i64: 1, 32>}, {pipeline_mode = #tpu.pipeline_mode<synchronous>, transform_indices = @transform_14, window_bounds = array<i64: 32, 128>}, {pipeline_mode = #tpu.pipeline_mode<synchronous>, transform_indices = @transform_15, window_bounds = array<i64: 1, 128>}, {pipeline_mode = #tpu.pipeline_mode<synchronous>, transform_indices = @transform_16, window_bounds = array<i64: 128, 32>}, {pipeline_mode = #tpu.pipeline_mode<synchronous>, transform_indices = @transform_17, window_bounds = array<i64: 1, 32>}, {pipeline_mode = #tpu.pipeline_mode<synchronous>, transform_indices = @transform_18, window_bounds = array<i64: 1, 32>}, {pipeline_mode = #tpu.pipeline_mode<synchronous>, transform_indices = @transform_19, window_bounds = array<i64: 1, 32>}, {transform_indices = @transform_20, window_bounds = array<i64: 1, 8, 32>}]} {
    %c0 = arith.constant 0 : index
    %c0_0 = arith.constant 0 : index
    %c0_1 = arith.constant 0 : index
    %0 = vector.load %arg1[%c0, %c0_0, %c0_1] : memref<1x8x32xf32, #tpu.memory_space<vmem>>, vector<1x8x32xf32>
    %1 = vector.shape_cast %0 : vector<1x8x32xf32> to vector<8x32xf32>
    %c0_2 = arith.constant 0 : index
    %c0_3 = arith.constant 0 : index
    %2 = vector.load %arg3[%c0_2, %c0_3] : memref<8x8xf32, #tpu.memory_space<vmem>>, vector<8x8xf32>
    %3 = vector.shape_cast %2 : vector<8x8xf32> to vector<1x8x8xf32>
    %c0_4 = arith.constant 0 : index
    %c0_5 = arith.constant 0 : index
    %4 = vector.load %arg4[%c0_4, %c0_5] : memref<8x8xf32, #tpu.memory_space<vmem>>, vector<8x8xf32>
    %5 = vector.shape_cast %4 : vector<8x8xf32> to vector<1x8x8xf32>
    %cst = arith.constant dense<0.000000e+00> : vector<1x8x32xf32>
    %6 = tpu.matmul %3, %0, %cst {dimension_numbers = #tpu.dot_dimension_numbers<[2], [1], [1], [2], [0, 0, 0, 1, 1, 2], [0], [0]>} : vector<1x8x8xf32>, vector<1x8x32xf32>, vector<1x8x32xf32> -> vector<1x8x32xf32>
    %cst_6 = arith.constant dense<0.000000e+00> : vector<1x8x32xf32>
    %7 = tpu.matmul %5, %6, %cst_6 {dimension_numbers = #tpu.dot_dimension_numbers<[2], [1], [1], [2], [0, 0, 0, 1, 1, 2], [0], [0]>} : vector<1x8x8xf32>, vector<1x8x32xf32>, vector<1x8x32xf32> -> vector<1x8x32xf32>
    %8 = vector.shape_cast %7 : vector<1x8x32xf32> to vector<8x32xf32>
    %c0_7 = arith.constant 0 : index
    %c0_8 = arith.constant 0 : index
    %9 = vector.load %arg5[%c0_7, %c0_8] : memref<1x32xf32, #tpu.memory_space<vmem>>, vector<1x32xf32>
    %10 = vector.broadcast %9 : vector<1x32xf32> to vector<8x32xf32>
    %11 = arith.mulf %10, %1 : vector<8x32xf32>
    %c0_9 = arith.constant 0 : index
    %c0_10 = arith.constant 0 : index
    %12 = vector.load %arg6[%c0_9, %c0_10] : memref<1x32xf32, #tpu.memory_space<vmem>>, vector<1x32xf32>
    %13 = vector.broadcast %12 : vector<1x32xf32> to vector<8x32xf32>
    %14 = arith.mulf %13, %8 : vector<8x32xf32>
    %15 = arith.addf %11, %14 : vector<8x32xf32>
    %c0_11 = arith.constant 0 : index
    %c0_12 = arith.constant 0 : index
    %16 = vector.load %arg7[%c0_11, %c0_12] : memref<1x32xf32, #tpu.memory_space<vmem>>, vector<1x32xf32>
    %c0_13 = arith.constant 0 : index
    %c0_14 = arith.constant 0 : index
    %17 = vector.load %arg8[%c0_13, %c0_14] : memref<1x32xf32, #tpu.memory_space<vmem>>, vector<1x32xf32>
    %cst_15 = arith.constant dense<0.000000e+00> : vector<8xf32>
    %18 = vector.multi_reduction <add>, %15, %cst_15 [1] : vector<8x32xf32> to vector<8xf32>
    %19 = vector.shape_cast %18 : vector<8xf32> to vector<8x1xf32>
    %cst_16 = arith.constant 3.200000e+01 : f32
    %20 = vector.broadcast %cst_16 : f32 to vector<8x1xf32>
    %21 = arith.divf %19, %20 : vector<8x1xf32>
    %22 = vector.broadcast %21 : vector<8x1xf32> to vector<8x32xf32>
    %23 = arith.subf %15, %22 : vector<8x32xf32>
    %24 = arith.mulf %23, %23 : vector<8x32xf32>
    %cst_17 = arith.constant dense<0.000000e+00> : vector<8xf32>
    %25 = vector.multi_reduction <add>, %24, %cst_17 [1] : vector<8x32xf32> to vector<8xf32>
    %26 = vector.shape_cast %25 : vector<8xf32> to vector<8x1xf32>
    %cst_18 = arith.constant 3.200000e+01 : f32
    %27 = vector.broadcast %cst_18 : f32 to vector<8x1xf32>
    %28 = arith.divf %26, %27 : vector<8x1xf32>
    %cst_19 = arith.constant 9.99999996E-13 : f32
    %29 = vector.broadcast %cst_19 : f32 to vector<8x1xf32>
    %30 = arith.addf %28, %29 : vector<8x1xf32>
    %31 = math.rsqrt %30 : vector<8x1xf32>
    %32 = vector.broadcast %31 : vector<8x1xf32> to vector<8x32xf32>
    %33 = arith.mulf %23, %32 : vector<8x32xf32>
    %34 = vector.broadcast %16 : vector<1x32xf32> to vector<8x32xf32>
    %35 = arith.mulf %34, %33 : vector<8x32xf32>
    %36 = vector.broadcast %17 : vector<1x32xf32> to vector<8x32xf32>
    %37 = arith.addf %35, %36 : vector<8x32xf32>
    %c0_20 = arith.constant 0 : index
    %c0_21 = arith.constant 0 : index
    %38 = vector.load %arg9[%c0_20, %c0_21] : memref<32x96xf32, #tpu.memory_space<vmem>>, vector<32x96xf32>
    %cst_22 = arith.constant dense<0.000000e+00> : vector<8x96xf32>
    %39 = tpu.matmul %1, %38, %cst_22 {dimension_numbers = #tpu.dot_dimension_numbers<[1], [0], [0], [1], [0, 0, 1, 1], [], []>} : vector<8x32xf32>, vector<32x96xf32>, vector<8x96xf32> -> vector<8x96xf32>
    %c0_23 = arith.constant 0 : index
    %c0_24 = arith.constant 0 : index
    %40 = vector.load %arg10[%c0_23, %c0_24] : memref<1x96xf32, #tpu.memory_space<vmem>>, vector<1x96xf32>
    %41 = vector.broadcast %40 : vector<1x96xf32> to vector<8x96xf32>
    %42 = arith.addf %39, %41 : vector<8x96xf32>
    %43 = vector.extract_strided_slice %42 {offsets = [0, 0], sizes = [8, 32], strides = [1, 1]} : vector<8x96xf32> to vector<8x32xf32>
    %44 = vector.shape_cast %43 : vector<8x32xf32> to vector<1x8x32xf32>
    %45 = vector.extract_strided_slice %42 {offsets = [0, 32], sizes = [8, 32], strides = [1, 1]} : vector<8x96xf32> to vector<8x32xf32>
    %46 = vector.shape_cast %45 : vector<8x32xf32> to vector<1x8x32xf32>
    %47 = vector.extract_strided_slice %42 {offsets = [0, 64], sizes = [8, 32], strides = [1, 1]} : vector<8x96xf32> to vector<8x32xf32>
    %48 = vector.shape_cast %47 : vector<8x32xf32> to vector<1x8x32xf32>
    %c0_25 = arith.constant 0 : index
    %c0_26 = arith.constant 0 : index
    %c0_27 = arith.constant 0 : index
    %49 = vector.load %arg2[%c0_25, %c0_26, %c0_27] : memref<1x8x8xf32, #tpu.memory_space<vmem>>, vector<1x8x8xf32>
    %50 = vector.extract_strided_slice %44 {offsets = [0, 0, 0], sizes = [1, 8, 16], strides = [1, 1, 1]} : vector<1x8x32xf32> to vector<1x8x16xf32>
    %51 = vector.extract_strided_slice %46 {offsets = [0, 0, 0], sizes = [1, 8, 16], strides = [1, 1, 1]} : vector<1x8x32xf32> to vector<1x8x16xf32>
    %52 = vector.extract_strided_slice %48 {offsets = [0, 0, 0], sizes = [1, 8, 16], strides = [1, 1, 1]} : vector<1x8x32xf32> to vector<1x8x16xf32>
    %cst_28 = arith.constant dense<0.000000e+00> : vector<1x8x8xf32>
    %53 = tpu.matmul %50, %51, %cst_28 {dimension_numbers = #tpu.dot_dimension_numbers<[2], [2], [1], [1], [0, 0, 0, 1, 1, 1], [0], [0]>} : vector<1x8x16xf32>, vector<1x8x16xf32>, vector<1x8x8xf32> -> vector<1x8x8xf32>
    %cst_29 = arith.constant 2.500000e-01 : f32
    %54 = vector.broadcast %cst_29 : f32 to vector<1x8x8xf32>
    %55 = arith.mulf %53, %54 : vector<1x8x8xf32>
    %56 = arith.addf %55, %49 : vector<1x8x8xf32>
    %cst_30 = arith.constant dense<0xFF800000> : vector<1x8xf32>
    %57 = vector.multi_reduction <maximumf>, %56, %cst_30 [2] : vector<1x8x8xf32> to vector<1x8xf32>
    %58 = vector.shape_cast %57 : vector<1x8xf32> to vector<1x8x1xf32>
    %59 = vector.broadcast %58 : vector<1x8x1xf32> to vector<1x8x8xf32>
    %60 = arith.subf %56, %59 : vector<1x8x8xf32>
    %61 = math.exp %60 : vector<1x8x8xf32>
    %cst_31 = arith.constant dense<0.000000e+00> : vector<1x8xf32>
    %62 = vector.multi_reduction <add>, %61, %cst_31 [2] : vector<1x8x8xf32> to vector<1x8xf32>
    %63 = vector.shape_cast %62 : vector<1x8xf32> to vector<1x8x1xf32>
    %64 = tpu.reciprocal %63 : vector<1x8x1xf32> -> vector<1x8x1xf32>
    %65 = vector.broadcast %64 : vector<1x8x1xf32> to vector<1x8x8xf32>
    %66 = arith.mulf %61, %65 : vector<1x8x8xf32>
    %cst_32 = arith.constant dense<0.000000e+00> : vector<1x8x16xf32>
    %67 = tpu.matmul %66, %52, %cst_32 {dimension_numbers = #tpu.dot_dimension_numbers<[2], [1], [1], [2], [0, 0, 0, 1, 1, 2], [0], [0]>} : vector<1x8x8xf32>, vector<1x8x16xf32>, vector<1x8x16xf32> -> vector<1x8x16xf32>
    %68 = vector.extract_strided_slice %44 {offsets = [0, 0, 16], sizes = [1, 8, 16], strides = [1, 1, 1]} : vector<1x8x32xf32> to vector<1x8x16xf32>
    %69 = vector.extract_strided_slice %46 {offsets = [0, 0, 16], sizes = [1, 8, 16], strides = [1, 1, 1]} : vector<1x8x32xf32> to vector<1x8x16xf32>
    %70 = vector.extract_strided_slice %48 {offsets = [0, 0, 16], sizes = [1, 8, 16], strides = [1, 1, 1]} : vector<1x8x32xf32> to vector<1x8x16xf32>
    %cst_33 = arith.constant dense<0.000000e+00> : vector<1x8x8xf32>
    %71 = tpu.matmul %68, %69, %cst_33 {dimension_numbers = #tpu.dot_dimension_numbers<[2], [2], [1], [1], [0, 0, 0, 1, 1, 1], [0], [0]>} : vector<1x8x16xf32>, vector<1x8x16xf32>, vector<1x8x8xf32> -> vector<1x8x8xf32>
    %cst_34 = arith.constant 2.500000e-01 : f32
    %72 = vector.broadcast %cst_34 : f32 to vector<1x8x8xf32>
    %73 = arith.mulf %71, %72 : vector<1x8x8xf32>
    %74 = arith.addf %73, %49 : vector<1x8x8xf32>
    %cst_35 = arith.constant dense<0xFF800000> : vector<1x8xf32>
    %75 = vector.multi_reduction <maximumf>, %74, %cst_35 [2] : vector<1x8x8xf32> to vector<1x8xf32>
    %76 = vector.shape_cast %75 : vector<1x8xf32> to vector<1x8x1xf32>
    %77 = vector.broadcast %76 : vector<1x8x1xf32> to vector<1x8x8xf32>
    %78 = arith.subf %74, %77 : vector<1x8x8xf32>
    %79 = math.exp %78 : vector<1x8x8xf32>
    %cst_36 = arith.constant dense<0.000000e+00> : vector<1x8xf32>
    %80 = vector.multi_reduction <add>, %79, %cst_36 [2] : vector<1x8x8xf32> to vector<1x8xf32>
    %81 = vector.shape_cast %80 : vector<1x8xf32> to vector<1x8x1xf32>
    %82 = tpu.reciprocal %81 : vector<1x8x1xf32> -> vector<1x8x1xf32>
    %83 = vector.broadcast %82 : vector<1x8x1xf32> to vector<1x8x8xf32>
    %84 = arith.mulf %79, %83 : vector<1x8x8xf32>
    %cst_37 = arith.constant dense<0.000000e+00> : vector<1x8x16xf32>
    %85 = tpu.matmul %84, %70, %cst_37 {dimension_numbers = #tpu.dot_dimension_numbers<[2], [1], [1], [2], [0, 0, 0, 1, 1, 2], [0], [0]>} : vector<1x8x8xf32>, vector<1x8x16xf32>, vector<1x8x16xf32> -> vector<1x8x16xf32>
    %86 = tpu.concatenate %67, %85 in 2 : vector<1x8x16xf32>, vector<1x8x16xf32> -> vector<1x8x32xf32>
    %87 = vector.shape_cast %86 : vector<1x8x32xf32> to vector<8x32xf32>
    %c0_38 = arith.constant 0 : index
    %c0_39 = arith.constant 0 : index
    %88 = vector.load %arg11[%c0_38, %c0_39] : memref<32x32xf32, #tpu.memory_space<vmem>>, vector<32x32xf32>
    %cst_40 = arith.constant dense<0.000000e+00> : vector<8x32xf32>
    %89 = tpu.matmul %87, %88, %cst_40 {dimension_numbers = #tpu.dot_dimension_numbers<[1], [0], [0], [1], [0, 0, 1, 1], [], []>} : vector<8x32xf32>, vector<32x32xf32>, vector<8x32xf32> -> vector<8x32xf32>
    %c0_41 = arith.constant 0 : index
    %c0_42 = arith.constant 0 : index
    %90 = vector.load %arg12[%c0_41, %c0_42] : memref<1x32xf32, #tpu.memory_space<vmem>>, vector<1x32xf32>
    %91 = vector.broadcast %90 : vector<1x32xf32> to vector<8x32xf32>
    %92 = arith.addf %89, %91 : vector<8x32xf32>
    %93 = arith.addf %92, %1 : vector<8x32xf32>
    %c0_43 = arith.constant 0 : index
    %c0_44 = arith.constant 0 : index
    %94 = vector.load %arg13[%c0_43, %c0_44] : memref<1x32xf32, #tpu.memory_space<vmem>>, vector<1x32xf32>
    %c0_45 = arith.constant 0 : index
    %c0_46 = arith.constant 0 : index
    %95 = vector.load %arg14[%c0_45, %c0_46] : memref<1x32xf32, #tpu.memory_space<vmem>>, vector<1x32xf32>
    %cst_47 = arith.constant dense<0.000000e+00> : vector<8xf32>
    %96 = vector.multi_reduction <add>, %93, %cst_47 [1] : vector<8x32xf32> to vector<8xf32>
    %97 = vector.shape_cast %96 : vector<8xf32> to vector<8x1xf32>
    %cst_48 = arith.constant 3.200000e+01 : f32
    %98 = vector.broadcast %cst_48 : f32 to vector<8x1xf32>
    %99 = arith.divf %97, %98 : vector<8x1xf32>
    %100 = vector.broadcast %99 : vector<8x1xf32> to vector<8x32xf32>
    %101 = arith.subf %93, %100 : vector<8x32xf32>
    %102 = arith.mulf %101, %101 : vector<8x32xf32>
    %cst_49 = arith.constant dense<0.000000e+00> : vector<8xf32>
    %103 = vector.multi_reduction <add>, %102, %cst_49 [1] : vector<8x32xf32> to vector<8xf32>
    %104 = vector.shape_cast %103 : vector<8xf32> to vector<8x1xf32>
    %cst_50 = arith.constant 3.200000e+01 : f32
    %105 = vector.broadcast %cst_50 : f32 to vector<8x1xf32>
    %106 = arith.divf %104, %105 : vector<8x1xf32>
    %cst_51 = arith.constant 9.99999996E-13 : f32
    %107 = vector.broadcast %cst_51 : f32 to vector<8x1xf32>
    %108 = arith.addf %106, %107 : vector<8x1xf32>
    %109 = math.rsqrt %108 : vector<8x1xf32>
    %110 = vector.broadcast %109 : vector<8x1xf32> to vector<8x32xf32>
    %111 = arith.mulf %101, %110 : vector<8x32xf32>
    %112 = vector.broadcast %94 : vector<1x32xf32> to vector<8x32xf32>
    %113 = arith.mulf %112, %111 : vector<8x32xf32>
    %114 = vector.broadcast %95 : vector<1x32xf32> to vector<8x32xf32>
    %115 = arith.addf %113, %114 : vector<8x32xf32>
    %cst_52 = arith.constant 0.699999988 : f32
    %116 = vector.broadcast %cst_52 : f32 to vector<8x32xf32>
    %117 = arith.mulf %116, %37 : vector<8x32xf32>
    %cst_53 = arith.constant 3.000000e-01 : f32
    %118 = vector.broadcast %cst_53 : f32 to vector<8x32xf32>
    %119 = arith.mulf %118, %115 : vector<8x32xf32>
    %120 = arith.addf %117, %119 : vector<8x32xf32>
    %c0_54 = arith.constant 0 : index
    %c0_55 = arith.constant 0 : index
    %121 = vector.load %arg15[%c0_54, %c0_55] : memref<32x128xf32, #tpu.memory_space<vmem>>, vector<32x128xf32>
    %cst_56 = arith.constant dense<0.000000e+00> : vector<8x128xf32>
    %122 = tpu.matmul %120, %121, %cst_56 {dimension_numbers = #tpu.dot_dimension_numbers<[1], [0], [0], [1], [0, 0, 1, 1], [], []>} : vector<8x32xf32>, vector<32x128xf32>, vector<8x128xf32> -> vector<8x128xf32>
    %c0_57 = arith.constant 0 : index
    %c0_58 = arith.constant 0 : index
    %123 = vector.load %arg16[%c0_57, %c0_58] : memref<1x128xf32, #tpu.memory_space<vmem>>, vector<1x128xf32>
    %124 = vector.broadcast %123 : vector<1x128xf32> to vector<8x128xf32>
    %125 = arith.addf %122, %124 : vector<8x128xf32>
    %cst_59 = arith.constant 0.000000e+00 : f32
    %126 = vector.broadcast %cst_59 : f32 to vector<8x128xf32>
    %127 = arith.maximumf %125, %126 : vector<8x128xf32>
    %c0_60 = arith.constant 0 : index
    %c0_61 = arith.constant 0 : index
    %128 = vector.load %arg17[%c0_60, %c0_61] : memref<128x32xf32, #tpu.memory_space<vmem>>, vector<128x32xf32>
    %cst_62 = arith.constant dense<0.000000e+00> : vector<8x32xf32>
    %129 = tpu.matmul %127, %128, %cst_62 {dimension_numbers = #tpu.dot_dimension_numbers<[1], [0], [0], [1], [0, 0, 1, 1], [], []>} : vector<8x128xf32>, vector<128x32xf32>, vector<8x32xf32> -> vector<8x32xf32>
    %c0_63 = arith.constant 0 : index
    %c0_64 = arith.constant 0 : index
    %130 = vector.load %arg18[%c0_63, %c0_64] : memref<1x32xf32, #tpu.memory_space<vmem>>, vector<1x32xf32>
    %131 = vector.broadcast %130 : vector<1x32xf32> to vector<8x32xf32>
    %132 = arith.addf %129, %131 : vector<8x32xf32>
    %133 = arith.addf %132, %120 : vector<8x32xf32>
    %c0_65 = arith.constant 0 : index
    %c0_66 = arith.constant 0 : index
    %134 = vector.load %arg19[%c0_65, %c0_66] : memref<1x32xf32, #tpu.memory_space<vmem>>, vector<1x32xf32>
    %c0_67 = arith.constant 0 : index
    %c0_68 = arith.constant 0 : index
    %135 = vector.load %arg20[%c0_67, %c0_68] : memref<1x32xf32, #tpu.memory_space<vmem>>, vector<1x32xf32>
    %cst_69 = arith.constant dense<0.000000e+00> : vector<8xf32>
    %136 = vector.multi_reduction <add>, %133, %cst_69 [1] : vector<8x32xf32> to vector<8xf32>
    %137 = vector.shape_cast %136 : vector<8xf32> to vector<8x1xf32>
    %cst_70 = arith.constant 3.200000e+01 : f32
    %138 = vector.broadcast %cst_70 : f32 to vector<8x1xf32>
    %139 = arith.divf %137, %138 : vector<8x1xf32>
    %140 = vector.broadcast %139 : vector<8x1xf32> to vector<8x32xf32>
    %141 = arith.subf %133, %140 : vector<8x32xf32>
    %142 = arith.mulf %141, %141 : vector<8x32xf32>
    %cst_71 = arith.constant dense<0.000000e+00> : vector<8xf32>
    %143 = vector.multi_reduction <add>, %142, %cst_71 [1] : vector<8x32xf32> to vector<8xf32>
    %144 = vector.shape_cast %143 : vector<8xf32> to vector<8x1xf32>
    %cst_72 = arith.constant 3.200000e+01 : f32
    %145 = vector.broadcast %cst_72 : f32 to vector<8x1xf32>
    %146 = arith.divf %144, %145 : vector<8x1xf32>
    %cst_73 = arith.constant 9.99999996E-13 : f32
    %147 = vector.broadcast %cst_73 : f32 to vector<8x1xf32>
    %148 = arith.addf %146, %147 : vector<8x1xf32>
    %149 = math.rsqrt %148 : vector<8x1xf32>
    %150 = vector.broadcast %149 : vector<8x1xf32> to vector<8x32xf32>
    %151 = arith.mulf %141, %150 : vector<8x32xf32>
    %152 = vector.broadcast %134 : vector<1x32xf32> to vector<8x32xf32>
    %153 = arith.mulf %152, %151 : vector<8x32xf32>
    %154 = vector.broadcast %135 : vector<1x32xf32> to vector<8x32xf32>
    %155 = arith.addf %153, %154 : vector<8x32xf32>
    %156 = vector.shape_cast %155 : vector<8x32xf32> to vector<1x8x32xf32>
    %c0_74 = arith.constant 0 : index
    %c0_75 = arith.constant 0 : index
    %c0_76 = arith.constant 0 : index
    %157 = vector.load %arg21[%c0_74, %c0_75, %c0_76] : memref<1x8x32xf32, #tpu.memory_space<vmem>>, vector<1x8x32xf32>
    tpu.vector_store %arg21[%c0_74, %c0_75, %c0_76], %156 {strides = array<i32>} : memref<1x8x32xf32, #tpu.memory_space<vmem>>, vector<1x8x32xf32>,
    return
  }
  func.func @transform_0(%arg0: i32) -> (i32, i32, i32) {
    %c0_i32 = arith.constant 0 : i32
    %c0_i32_0 = arith.constant 0 : i32
    %c0_i32_1 = arith.constant 0 : i32
    return %arg0, %c0_i32, %c0_i32_0 : i32, i32, i32
  }
  func.func @transform_1(%arg0: i32) -> (i32, i32, i32) {
    %c0_i32 = arith.constant 0 : i32
    %c0_i32_0 = arith.constant 0 : i32
    %c0_i32_1 = arith.constant 0 : i32
    return %arg0, %c0_i32, %c0_i32_0 : i32, i32, i32
  }
  func.func @transform_2(%arg0: i32) -> (i32, i32) {
    %c0_i32 = arith.constant 0 : i32
    %c0_i32_0 = arith.constant 0 : i32
    %c0_i32_1 = arith.constant 0 : i32
    return %c0_i32, %c0_i32_0 : i32, i32
  }
  func.func @transform_3(%arg0: i32) -> (i32, i32) {
    %c0_i32 = arith.constant 0 : i32
    %c0_i32_0 = arith.constant 0 : i32
    %c0_i32_1 = arith.constant 0 : i32
    return %c0_i32, %c0_i32_0 : i32, i32
  }
  func.func @transform_4(%arg0: i32) -> (i32, i32) {
    %c0_i32 = arith.constant 0 : i32
    %c0_i32_0 = arith.constant 0 : i32
    %c0_i32_1 = arith.constant 0 : i32
    return %c0_i32, %c0_i32_0 : i32, i32
  }
  func.func @transform_5(%arg0: i32) -> (i32, i32) {
    %c0_i32 = arith.constant 0 : i32
    %c0_i32_0 = arith.constant 0 : i32
    %c0_i32_1 = arith.constant 0 : i32
    return %c0_i32, %c0_i32_0 : i32, i32
  }
  func.func @transform_6(%arg0: i32) -> (i32, i32) {
    %c0_i32 = arith.constant 0 : i32
    %c0_i32_0 = arith.constant 0 : i32
    %c0_i32_1 = arith.constant 0 : i32
    return %c0_i32, %c0_i32_0 : i32, i32
  }
  func.func @transform_7(%arg0: i32) -> (i32, i32) {
    %c0_i32 = arith.constant 0 : i32
    %c0_i32_0 = arith.constant 0 : i32
    %c0_i32_1 = arith.constant 0 : i32
    return %c0_i32, %c0_i32_0 : i32, i32
  }
  func.func @transform_8(%arg0: i32) -> (i32, i32) {
    %c0_i32 = arith.constant 0 : i32
    %c0_i32_0 = arith.constant 0 : i32
    %c0_i32_1 = arith.constant 0 : i32
    return %c0_i32, %c0_i32_0 : i32, i32
  }
  func.func @transform_9(%arg0: i32) -> (i32, i32) {
    %c0_i32 = arith.constant 0 : i32
    %c0_i32_0 = arith.constant 0 : i32
    %c0_i32_1 = arith.constant 0 : i32
    return %c0_i32, %c0_i32_0 : i32, i32
  }
  func.func @transform_10(%arg0: i32) -> (i32, i32) {
    %c0_i32 = arith.constant 0 : i32
    %c0_i32_0 = arith.constant 0 : i32
    %c0_i32_1 = arith.constant 0 : i32
    return %c0_i32, %c0_i32_0 : i32, i32
  }
  func.func @transform_11(%arg0: i32) -> (i32, i32) {
    %c0_i32 = arith.constant 0 : i32
    %c0_i32_0 = arith.constant 0 : i32
    %c0_i32_1 = arith.constant 0 : i32
    return %c0_i32, %c0_i32_0 : i32, i32
  }
  func.func @transform_12(%arg0: i32) -> (i32, i32) {
    %c0_i32 = arith.constant 0 : i32
    %c0_i32_0 = arith.constant 0 : i32
    %c0_i32_1 = arith.constant 0 : i32
    return %c0_i32, %c0_i32_0 : i32, i32
  }
  func.func @transform_13(%arg0: i32) -> (i32, i32) {
    %c0_i32 = arith.constant 0 : i32
    %c0_i32_0 = arith.constant 0 : i32
    %c0_i32_1 = arith.constant 0 : i32
    return %c0_i32, %c0_i32_0 : i32, i32
  }
  func.func @transform_14(%arg0: i32) -> (i32, i32) {
    %c0_i32 = arith.constant 0 : i32
    %c0_i32_0 = arith.constant 0 : i32
    %c0_i32_1 = arith.constant 0 : i32
    return %c0_i32, %c0_i32_0 : i32, i32
  }
  func.func @transform_15(%arg0: i32) -> (i32, i32) {
    %c0_i32 = arith.constant 0 : i32
    %c0_i32_0 = arith.constant 0 : i32
    %c0_i32_1 = arith.constant 0 : i32
    return %c0_i32, %c0_i32_0 : i32, i32
  }
  func.func @transform_16(%arg0: i32) -> (i32, i32) {
    %c0_i32 = arith.constant 0 : i32
    %c0_i32_0 = arith.constant 0 : i32
    %c0_i32_1 = arith.constant 0 : i32
    return %c0_i32, %c0_i32_0 : i32, i32
  }
  func.func @transform_17(%arg0: i32) -> (i32, i32) {
    %c0_i32 = arith.constant 0 : i32
    %c0_i32_0 = arith.constant 0 : i32
    %c0_i32_1 = arith.constant 0 : i32
    return %c0_i32, %c0_i32_0 : i32, i32
  }
  func.func @transform_18(%arg0: i32) -> (i32, i32) {
    %c0_i32 = arith.constant 0 : i32
    %c0_i32_0 = arith.constant 0 : i32
    %c0_i32_1 = arith.constant 0 : i32
    return %c0_i32, %c0_i32_0 : i32, i32
  }
  func.func @transform_19(%arg0: i32) -> (i32, i32) {
    %c0_i32 = arith.constant 0 : i32
    %c0_i32_0 = arith.constant 0 : i32
    %c0_i32_1 = arith.constant 0 : i32
    return %c0_i32, %c0_i32_0 : i32, i32
  }
  func.func @transform_20(%arg0: i32) -> (i32, i32, i32) {
    %c0_i32 = arith.constant 0 : i32
    %c0_i32_0 = arith.constant 0 : i32
    %c0_i32_1 = arith.constant 0 : i32
    return %arg0, %c0_i32, %c0_i32_0 : i32, i32, i32
  }
}

</mosaic_0001>

<llo_original>
// kernel: tpu_custom_call.1
$region0: #{tpu_custom_call.1}
  #allocation0 [shape = 'u32[]', space=smem, size = 0x4, offset = 0x4, fixed_abs, tag = 'smem constant byte address 0x4 - core index']
  #allocation1 [shape = 'u32[72,128]{1,0:T(1,128)}', space=vmem, size = 0x9000, scoped, tag = 'internal scratch']
  %s0 = inlined_call_operand.vmem [shape: f32[2,8,32], index: 0, kind: input, shape index: {}]
  %s1 = inlined_call_operand.vmem [shape: f32[2,8,8], index: 1, kind: input, shape index: {}]
  %s2 = inlined_call_operand.vmem [shape: f32[8,8], index: 2, kind: input, shape index: {}]
  %s3 = inlined_call_operand.vmem [shape: f32[8,8], index: 3, kind: input, shape index: {}]
  %s4 = inlined_call_operand.vmem [shape: f32[1,32], index: 4, kind: input, shape index: {}]
  %s5 = inlined_call_operand.vmem [shape: f32[1,32], index: 5, kind: input, shape index: {}]
  %s6 = inlined_call_operand.vmem [shape: f32[1,32], index: 6, kind: input, shape index: {}]
  %s7 = inlined_call_operand.vmem [shape: f32[1,32], index: 7, kind: input, shape index: {}]
  %s8 = inlined_call_operand.vmem [shape: f32[32,96], index: 8, kind: input, shape index: {}]
  %s9 = inlined_call_operand.vmem [shape: f32[1,96], index: 9, kind: input, shape index: {}]
  %s10 = inlined_call_operand.vmem [shape: f32[32,32], index: 10, kind: input, shape index: {}]
  %s11 = inlined_call_operand.vmem [shape: f32[1,32], index: 11, kind: input, shape index: {}]
  %s12 = inlined_call_operand.vmem [shape: f32[1,32], index: 12, kind: input, shape index: {}]
  %s13 = inlined_call_operand.vmem [shape: f32[1,32], index: 13, kind: input, shape index: {}]
  %s14 = inlined_call_operand.vmem [shape: f32[32,128], index: 14, kind: input, shape index: {}]
  %s15 = inlined_call_operand.vmem [shape: f32[1,128], index: 15, kind: input, shape index: {}]
  %s16 = inlined_call_operand.vmem [shape: f32[128,32], index: 16, kind: input, shape index: {}]
  %s17 = inlined_call_operand.vmem [shape: f32[1,32], index: 17, kind: input, shape index: {}]
  %s18 = inlined_call_operand.vmem [shape: f32[1,32], index: 18, kind: input, shape index: {}]
  %s19 = inlined_call_operand.vmem [shape: f32[1,32], index: 19, kind: input, shape index: {}]
  %s20 = inlined_call_operand.hbm [shape: f32[2,8,32], index: 20, kind: output, shape index: {}]
  %s21 = sld [smem:[#allocation0]]
  $region113: #{tpu_custom_call.1} parent=0
    _
  %s23 = ssub.s32 1, %s21
  %s24 = scalar_select 0, %s23, %s21
  $region1: #{tpu_custom_call.1} parent=0
    #allocation2 [shape = 'u8[8192]{0}', space=vmem, size = 0x2000, scoped, tag = 'output window, operand 0']
    #allocation3 [shape = 's32[2]{0}', space=sflag, size = 0x8, scoped, tag = 'scoped memory for tpu_custom_call.1']
    %25 = vsyncpa [#allocation3], 0
    %s26 = scalar_lea.sflag [#allocation3], 1
    %27 = vsyncpa %s26, 0
    loop: start=0, step=1, limit=4
    $region2: #{tpu_custom_call.1} parent=1 // loop_pre_header
      _
    $region3: #{tpu_custom_call.1} parent=1 // loop_header
      %s29 = sphi 0, %s33
      %p30 = scmp.ge.s32.totalorder %s29, 4
      %s39 = sphi 0, %s41
      %s42 = sphi 0, %s39
      %s43 = sphi 0, %s42
      %s59 = sphi 0, %s43
      %s65 = sphi 0, %s67
      %s68 = sphi 0, %s65
      %s69 = sphi 0, %s68
      %s85 = sphi 0, %s69
      %s89 = sphi 0, %s89
      %s91 = sphi 0, %s89
      %s92 = sphi 0, %s91
      %s106 = sphi 0, %s92
      %s110 = sphi 0, %s110
      %s112 = sphi 0, %s110
      %s113 = sphi 0, %s112
      %s127 = sphi 0, %s113
      %s131 = sphi 0, %s131
      %s133 = sphi 0, %s131
      %s134 = sphi 0, %s133
      %s148 = sphi 0, %s134
      %s152 = sphi 0, %s152
      %s154 = sphi 0, %s152
      %s155 = sphi 0, %s154
      %s169 = sphi 0, %s155
      %s173 = sphi 0, %s173
      %s175 = sphi 0, %s173
      %s176 = sphi 0, %s175
      %s190 = sphi 0, %s176
      %s194 = sphi 0, %s194
      %s196 = sphi 0, %s194
      %s197 = sphi 0, %s196
      %s211 = sphi 0, %s197
      %s215 = sphi 0, %s215
      %s217 = sphi 0, %s215
      %s218 = sphi 0, %s217
      %s232 = sphi 0, %s218
      %s236 = sphi 0, %s236
      %s238 = sphi 0, %s236
      %s239 = sphi 0, %s238
      %s253 = sphi 0, %s239
      %s257 = sphi 0, %s257
      %s259 = sphi 0, %s257
      %s260 = sphi 0, %s259
      %s274 = sphi 0, %s260
      %s278 = sphi 0, %s278
      %s280 = sphi 0, %s278
      %s281 = sphi 0, %s280
      %s295 = sphi 0, %s281
      %s299 = sphi 0, %s299
      %s301 = sphi 0, %s299
      %s302 = sphi 0, %s301
      %s316 = sphi 0, %s302
      %s320 = sphi 0, %s320
      %s322 = sphi 0, %s320
      %s323 = sphi 0, %s322
      %s337 = sphi 0, %s323
      %s341 = sphi 0, %s341
      %s343 = sphi 0, %s341
      %s344 = sphi 0, %s343
      %s358 = sphi 0, %s344
      %s362 = sphi 0, %s362
      %s364 = sphi 0, %s362
      %s365 = sphi 0, %s364
      %s379 = sphi 0, %s365
      %s383 = sphi 0, %s383
      %s385 = sphi 0, %s383
      %s386 = sphi 0, %s385
      %s400 = sphi 0, %s386
      %s404 = sphi 0, %s404
      %s406 = sphi 0, %s404
      %s407 = sphi 0, %s406
      %s421 = sphi 0, %s407
      %s425 = sphi 0, %s425
      %s427 = sphi 0, %s425
      %s428 = sphi 0, %s427
      %s442 = sphi 0, %s428
      %s446 = sphi 0, %s446
      %s448 = sphi 0, %s446
      %s449 = sphi 0, %s448
      %s463 = sphi 0, %s449
      %s469 = sphi 0, %s471
      %s472 = sphi 0, %s469
      %s473 = sphi 0, %s472
      %s489 = sphi 0, %s473
    $region4: #{tpu_custom_call.1} parent=1 // loop_header_branch
      %32 = sbr.rel (%p30) target = $region8
    $region5: #{tpu_custom_call.1} parent=1 // loop_body
      %s34 = ssub.s32 %s29, 1
      %s35 = ssub.s32 %s29, 2
      %s36 = sadd.s32 %s29, 1
      %s37 = ssub.s32 %s29, %s36
      %p38 = scmp.eq.s32.totalorder %s37, 0
      %s40 = sadd.s32 %s39, 1
      %s41 = scalar_select %p38, %s39, %s40
      %p44 = pneg %p38
      %p45 = scmp.eq.s32.totalorder %s29, 1
      %p46 = por %p44, %p45
      %p47 = scmp.ne.s32.totalorder %s39, %s42
      %p48 = scmp.eq.s32.totalorder %s29, 0
      %p49 = por %p47, %p48
      %p50 = scmp.ne.s32.totalorder %s39, %s42
      %p51 = scmp.eq.s32.totalorder %s34, 1
      %p52 = por %p50, %p51
      %p53 = scmp.ne.s32.totalorder %s42, %s43
      %p54 = scmp.eq.s32.totalorder %s34, 0
      %p55 = por %p53, %p54
      %p56 = scmp.ne.s32.totalorder %s42, %s43
      %p57 = scmp.eq.s32.totalorder %s35, 1
      %p58 = por %p56, %p57
      %p60 = scmp.ne.s32.totalorder %s43, %s59
      %p61 = scmp.eq.s32.totalorder %s35, 0
      %p62 = por %p60, %p61
      %s63 = ssub.s32 %s29, %s36
      %p64 = scmp.eq.s32.totalorder %s63, 0
      %s66 = sadd.s32 %s65, 1
      %s67 = scalar_select %p64, %s65, %s66
      %p70 = pneg %p64
      %p71 = scmp.eq.s32.totalorder %s29, 1
      %p72 = por %p70, %p71
      %p73 = scmp.ne.s32.totalorder %s65, %s68
      %p74 = scmp.eq.s32.totalorder %s29, 0
      %p75 = por %p73, %p74
      %p76 = scmp.ne.s32.totalorder %s65, %s68
      %p77 = scmp.eq.s32.totalorder %s34, 1
      %p78 = por %p76, %p77
      %p79 = scmp.ne.s32.totalorder %s68, %s69
      %p80 = scmp.eq.s32.totalorder %s34, 0
      %p81 = por %p79, %p80
      %p82 = scmp.ne.s32.totalorder %s68, %s69
      %p83 = scmp.eq.s32.totalorder %s35, 1
      %p84 = por %p82, %p83
      %p86 = scmp.ne.s32.totalorder %s69, %s85
      %p87 = scmp.eq.s32.totalorder %s35, 0
      %p88 = por %p86, %p87
      %s90 = sadd.s32 %s89, 1
      %p93 = scmp.eq.s32.totalorder %s29, 1
      %p94 = scmp.ne.s32.totalorder %s89, %s91
      %p95 = scmp.eq.s32.totalorder %s29, 0
      %p96 = por %p94, %p95
      %p97 = scmp.ne.s32.totalorder %s89, %s91
      %p98 = scmp.eq.s32.totalorder %s34, 1
      %p99 = por %p97, %p98
      %p100 = scmp.ne.s32.totalorder %s91, %s92
      %p101 = scmp.eq.s32.totalorder %s34, 0
      %p102 = por %p100, %p101
      %p103 = scmp.ne.s32.totalorder %s91, %s92
      %p104 = scmp.eq.s32.totalorder %s35, 1
      %p105 = por %p103, %p104
      %p107 = scmp.ne.s32.totalorder %s92, %s106
      %p108 = scmp.eq.s32.totalorder %s35, 0
      %p109 = por %p107, %p108
      %s111 = sadd.s32 %s110, 1
      %p114 = scmp.eq.s32.totalorder %s29, 1
      %p115 = scmp.ne.s32.totalorder %s110, %s112
      %p116 = scmp.eq.s32.totalorder %s29, 0
      %p117 = por %p115, %p116
      %p118 = scmp.ne.s32.totalorder %s110, %s112
      %p119 = scmp.eq.s32.totalorder %s34, 1
      %p120 = por %p118, %p119
      %p121 = scmp.ne.s32.totalorder %s112, %s113
      %p122 = scmp.eq.s32.totalorder %s34, 0
      %p123 = por %p121, %p122
      %p124 = scmp.ne.s32.totalorder %s112, %s113
      %p125 = scmp.eq.s32.totalorder %s35, 1
      %p126 = por %p124, %p125
      %p128 = scmp.ne.s32.totalorder %s113, %s127
      %p129 = scmp.eq.s32.totalorder %s35, 0
      %p130 = por %p128, %p129
      %s132 = sadd.s32 %s131, 1
      %p135 = scmp.eq.s32.totalorder %s29, 1
      %p136 = scmp.ne.s32.totalorder %s131, %s133
      %p137 = scmp.eq.s32.totalorder %s29, 0
      %p138 = por %p136, %p137
      %p139 = scmp.ne.s32.totalorder %s131, %s133
      %p140 = scmp.eq.s32.totalorder %s34, 1
      %p141 = por %p139, %p140
      %p142 = scmp.ne.s32.totalorder %s133, %s134
      %p143 = scmp.eq.s32.totalorder %s34, 0
      %p144 = por %p142, %p143
      %p145 = scmp.ne.s32.totalorder %s133, %s134
      %p146 = scmp.eq.s32.totalorder %s35, 1
      %p147 = por %p145, %p146
      %p149 = scmp.ne.s32.totalorder %s134, %s148
      %p150 = scmp.eq.s32.totalorder %s35, 0
      %p151 = por %p149, %p150
      %s153 = sadd.s32 %s152, 1
      %p156 = scmp.eq.s32.totalorder %s29, 1
      %p157 = scmp.ne.s32.totalorder %s152, %s154
      %p158 = scmp.eq.s32.totalorder %s29, 0
      %p159 = por %p157, %p158
      %p160 = scmp.ne.s32.totalorder %s152, %s154
      %p161 = scmp.eq.s32.totalorder %s34, 1
      %p162 = por %p160, %p161
      %p163 = scmp.ne.s32.totalorder %s154, %s155
      %p164 = scmp.eq.s32.totalorder %s34, 0
      %p165 = por %p163, %p164
      %p166 = scmp.ne.s32.totalorder %s154, %s155
      %p167 = scmp.eq.s32.totalorder %s35, 1
      %p168 = por %p166, %p167
      %p170 = scmp.ne.s32.totalorder %s155, %s169
      %p171 = scmp.eq.s32.totalorder %s35, 0
      %p172 = por %p170, %p171
      %s174 = sadd.s32 %s173, 1
      %p177 = scmp.eq.s32.totalorder %s29, 1
      %p178 = scmp.ne.s32.totalorder %s173, %s175
      %p179 = scmp.eq.s32.totalorder %s29, 0
      %p180 = por %p178, %p179
      %p181 = scmp.ne.s32.totalorder %s173, %s175
      %p182 = scmp.eq.s32.totalorder %s34, 1
      %p183 = por %p181, %p182
      %p184 = scmp.ne.s32.totalorder %s175, %s176
      %p185 = scmp.eq.s32.totalorder %s34, 0
      %p186 = por %p184, %p185
      %p187 = scmp.ne.s32.totalorder %s175, %s176
      %p188 = scmp.eq.s32.totalorder %s35, 1
      %p189 = por %p187, %p188
      %p191 = scmp.ne.s32.totalorder %s176, %s190
      %p192 = scmp.eq.s32.totalorder %s35, 0
      %p193 = por %p191, %p192
      %s195 = sadd.s32 %s194, 1
      %p198 = scmp.eq.s32.totalorder %s29, 1
      %p199 = scmp.ne.s32.totalorder %s194, %s196
      %p200 = scmp.eq.s32.totalorder %s29, 0
      %p201 = por %p199, %p200
      %p202 = scmp.ne.s32.totalorder %s194, %s196
      %p203 = scmp.eq.s32.totalorder %s34, 1
      %p204 = por %p202, %p203
      %p205 = scmp.ne.s32.totalorder %s196, %s197
      %p206 = scmp.eq.s32.totalorder %s34, 0
      %p207 = por %p205, %p206
      %p208 = scmp.ne.s32.totalorder %s196, %s197
      %p209 = scmp.eq.s32.totalorder %s35, 1
      %p210 = por %p208, %p209
      %p212 = scmp.ne.s32.totalorder %s197, %s211
      %p213 = scmp.eq.s32.totalorder %s35, 0
      %p214 = por %p212, %p213
      %s216 = sadd.s32 %s215, 1
      %p219 = scmp.eq.s32.totalorder %s29, 1
      %p220 = scmp.ne.s32.totalorder %s215, %s217
      %p221 = scmp.eq.s32.totalorder %s29, 0
      %p222 = por %p220, %p221
      %p223 = scmp.ne.s32.totalorder %s215, %s217
      %p224 = scmp.eq.s32.totalorder %s34, 1
      %p225 = por %p223, %p224
      %p226 = scmp.ne.s32.totalorder %s217, %s218
      %p227 = scmp.eq.s32.totalorder %s34, 0
      %p228 = por %p226, %p227
      %p229 = scmp.ne.s32.totalorder %s217, %s218
      %p230 = scmp.eq.s32.totalorder %s35, 1
      %p231 = por %p229, %p230
      %p233 = scmp.ne.s32.totalorder %s218, %s232
      %p234 = scmp.eq.s32.totalorder %s35, 0
      %p235 = por %p233, %p234
      %s237 = sadd.s32 %s236, 1
      %p240 = scmp.eq.s32.totalorder %s29, 1
      %p241 = scmp.ne.s32.totalorder %s236, %s238
      %p242 = scmp.eq.s32.totalorder %s29, 0
      %p243 = por %p241, %p242
      %p244 = scmp.ne.s32.totalorder %s236, %s238
      %p245 = scmp.eq.s32.totalorder %s34, 1
      %p246 = por %p244, %p245
      %p247 = scmp.ne.s32.totalorder %s238, %s239
      %p248 = scmp.eq.s32.totalorder %s34, 0
      %p249 = por %p247, %p248
      %p250 = scmp.ne.s32.totalorder %s238, %s239
      %p251 = scmp.eq.s32.totalorder %s35, 1
      %p252 = por %p250, %p251
      %p254 = scmp.ne.s32.totalorder %s239, %s253
      %p255 = scmp.eq.s32.totalorder %s35, 0
      %p256 = por %p254, %p255
      %s258 = sadd.s32 %s257, 1
      %p261 = scmp.eq.s32.totalorder %s29, 1
      %p262 = scmp.ne.s32.totalorder %s257, %s259
      %p263 = scmp.eq.s32.totalorder %s29, 0
      %p264 = por %p262, %p263
      %p265 = scmp.ne.s32.totalorder %s257, %s259
      %p266 = scmp.eq.s32.totalorder %s34, 1
      %p267 = por %p265, %p266
      %p268 = scmp.ne.s32.totalorder %s259, %s260
      %p269 = scmp.eq.s32.totalorder %s34, 0
      %p270 = por %p268, %p269
      %p271 = scmp.ne.s32.totalorder %s259, %s260
      %p272 = scmp.eq.s32.totalorder %s35, 1
      %p273 = por %p271, %p272
      %p275 = scmp.ne.s32.totalorder %s260, %s274
      %p276 = scmp.eq.s32.totalorder %s35, 0
      %p277 = por %p275, %p276
      %s279 = sadd.s32 %s278, 1
      %p282 = scmp.eq.s32.totalorder %s29, 1
      %p283 = scmp.ne.s32.totalorder %s278, %s280
      %p284 = scmp.eq.s32.totalorder %s29, 0
      %p285 = por %p283, %p284
      %p286 = scmp.ne.s32.totalorder %s278, %s280
      %p287 = scmp.eq.s32.totalorder %s34, 1
      %p288 = por %p286, %p287
      %p289 = scmp.ne.s32.totalorder %s280, %s281
      %p290 = scmp.eq.s32.totalorder %s34, 0
      %p291 = por %p289, %p290
      %p292 = scmp.ne.s32.totalorder %s280, %s281
      %p293 = scmp.eq.s32.totalorder %s35, 1
      %p294 = por %p292, %p293
      %p296 = scmp.ne.s32.totalorder %s281, %s295
      %p297 = scmp.eq.s32.totalorder %s35, 0
      %p298 = por %p296, %p297
      %s300 = sadd.s32 %s299, 1
      %p303 = scmp.eq.s32.totalorder %s29, 1
      %p304 = scmp.ne.s32.totalorder %s299, %s301
      %p305 = scmp.eq.s32.totalorder %s29, 0
      %p306 = por %p304, %p305
      %p307 = scmp.ne.s32.totalorder %s299, %s301
      %p308 = scmp.eq.s32.totalorder %s34, 1
      %p309 = por %p307, %p308
      %p310 = scmp.ne.s32.totalorder %s301, %s302
      %p311 = scmp.eq.s32.totalorder %s34, 0
      %p312 = por %p310, %p311
      %p313 = scmp.ne.s32.totalorder %s301, %s302
      %p314 = scmp.eq.s32.totalorder %s35, 1
      %p315 = por %p313, %p314
      %p317 = scmp.ne.s32.totalorder %s302, %s316
      %p318 = scmp.eq.s32.totalorder %s35, 0
      %p319 = por %p317, %p318
      %s321 = sadd.s32 %s320, 1
      %p324 = scmp.eq.s32.totalorder %s29, 1
      %p325 = scmp.ne.s32.totalorder %s320, %s322
      %p326 = scmp.eq.s32.totalorder %s29, 0
      %p327 = por %p325, %p326
      %p328 = scmp.ne.s32.totalorder %s320, %s322
      %p329 = scmp.eq.s32.totalorder %s34, 1
      %p330 = por %p328, %p329
      %p331 = scmp.ne.s32.totalorder %s322, %s323
      %p332 = scmp.eq.s32.totalorder %s34, 0
      %p333 = por %p331, %p332
      %p334 = scmp.ne.s32.totalorder %s322, %s323
      %p335 = scmp.eq.s32.totalorder %s35, 1
      %p336 = por %p334, %p335
      %p338 = scmp.ne.s32.totalorder %s323, %s337
      %p339 = scmp.eq.s32.totalorder %s35, 0
      %p340 = por %p338, %p339
      %s342 = sadd.s32 %s341, 1
      %p345 = scmp.eq.s32.totalorder %s29, 1
      %p346 = scmp.ne.s32.totalorder %s341, %s343
      %p347 = scmp.eq.s32.totalorder %s29, 0
      %p348 = por %p346, %p347
      %p349 = scmp.ne.s32.totalorder %s341, %s343
      %p350 = scmp.eq.s32.totalorder %s34, 1
      %p351 = por %p349, %p350
      %p352 = scmp.ne.s32.totalorder %s343, %s344
      %p353 = scmp.eq.s32.totalorder %s34, 0
      %p354 = por %p352, %p353
      %p355 = scmp.ne.s32.totalorder %s343, %s344
      %p356 = scmp.eq.s32.totalorder %s35, 1
      %p357 = por %p355, %p356
      %p359 = scmp.ne.s32.totalorder %s344, %s358
      %p360 = scmp.eq.s32.totalorder %s35, 0
      %p361 = por %p359, %p360
      %s363 = sadd.s32 %s362, 1
      %p366 = scmp.eq.s32.totalorder %s29, 1
      %p367 = scmp.ne.s32.totalorder %s362, %s364
      %p368 = scmp.eq.s32.totalorder %s29, 0
      %p369 = por %p367, %p368
      %p370 = scmp.ne.s32.totalorder %s362, %s364
      %p371 = scmp.eq.s32.totalorder %s34, 1
      %p372 = por %p370, %p371
      %p373 = scmp.ne.s32.totalorder %s364, %s365
      %p374 = scmp.eq.s32.totalorder %s34, 0
      %p375 = por %p373, %p374
      %p376 = scmp.ne.s32.totalorder %s364, %s365
      %p377 = scmp.eq.s32.totalorder %s35, 1
      %p378 = por %p376, %p377
      %p380 = scmp.ne.s32.totalorder %s365, %s379
      %p381 = scmp.eq.s32.totalorder %s35, 0
      %p382 = por %p380, %p381
      %s384 = sadd.s32 %s383, 1
      %p387 = scmp.eq.s32.totalorder %s29, 1
      %p388 = scmp.ne.s32.totalorder %s383, %s385
      %p389 = scmp.eq.s32.totalorder %s29, 0
      %p390 = por %p388, %p389
      %p391 = scmp.ne.s32.totalorder %s383, %s385
      %p392 = scmp.eq.s32.totalorder %s34, 1
      %p393 = por %p391, %p392
      %p394 = scmp.ne.s32.totalorder %s385, %s386
      %p395 = scmp.eq.s32.totalorder %s34, 0
      %p396 = por %p394, %p395
      %p397 = scmp.ne.s32.totalorder %s385, %s386
      %p398 = scmp.eq.s32.totalorder %s35, 1
      %p399 = por %p397, %p398
      %p401 = scmp.ne.s32.totalorder %s386, %s400
      %p402 = scmp.eq.s32.totalorder %s35, 0
      %p403 = por %p401, %p402
      %s405 = sadd.s32 %s404, 1
      %p408 = scmp.eq.s32.totalorder %s29, 1
      %p409 = scmp.ne.s32.totalorder %s404, %s406
      %p410 = scmp.eq.s32.totalorder %s29, 0
      %p411 = por %p409, %p410
      %p412 = scmp.ne.s32.totalorder %s404, %s406
      %p413 = scmp.eq.s32.totalorder %s34, 1
      %p414 = por %p412, %p413
      %p415 = scmp.ne.s32.totalorder %s406, %s407
      %p416 = scmp.eq.s32.totalorder %s34, 0
      %p417 = por %p415, %p416
      %p418 = scmp.ne.s32.totalorder %s406, %s407
      %p419 = scmp.eq.s32.totalorder %s35, 1
      %p420 = por %p418, %p419
      %p422 = scmp.ne.s32.totalorder %s407, %s421
      %p423 = scmp.eq.s32.totalorder %s35, 0
      %p424 = por %p422, %p423
      %s426 = sadd.s32 %s425, 1
      %p429 = scmp.eq.s32.totalorder %s29, 1
      %p430 = scmp.ne.s32.totalorder %s425, %s427
      %p431 = scmp.eq.s32.totalorder %s29, 0
      %p432 = por %p430, %p431
      %p433 = scmp.ne.s32.totalorder %s425, %s427
      %p434 = scmp.eq.s32.totalorder %s34, 1
      %p435 = por %p433, %p434
      %p436 = scmp.ne.s32.totalorder %s427, %s428
      %p437 = scmp.eq.s32.totalorder %s34, 0
      %p438 = por %p436, %p437
      %p439 = scmp.ne.s32.totalorder %s427, %s428
      %p440 = scmp.eq.s32.totalorder %s35, 1
      %p441 = por %p439, %p440
      %p443 = scmp.ne.s32.totalorder %s428, %s442
      %p444 = scmp.eq.s32.totalorder %s35, 0
      %p445 = por %p443, %p444
      %s447 = sadd.s32 %s446, 1
      %p450 = scmp.eq.s32.totalorder %s29, 1
      %p451 = scmp.ne.s32.totalorder %s446, %s448
      %p452 = scmp.eq.s32.totalorder %s29, 0
      %p453 = por %p451, %p452
      %p454 = scmp.ne.s32.totalorder %s446, %s448
      %p455 = scmp.eq.s32.totalorder %s34, 1
      %p456 = por %p454, %p455
      %p457 = scmp.ne.s32.totalorder %s448, %s449
      %p458 = scmp.eq.s32.totalorder %s34, 0
      %p459 = por %p457, %p458
      %p460 = scmp.ne.s32.totalorder %s448, %s449
      %p461 = scmp.eq.s32.totalorder %s35, 1
      %p462 = por %p460, %p461
      %p464 = scmp.ne.s32.totalorder %s449, %s463
      %p465 = scmp.eq.s32.totalorder %s35, 0
      %p466 = por %p464, %p465
      %s467 = ssub.s32 %s29, %s36
      %p468 = scmp.eq.s32.totalorder %s467, 0
      %s470 = sadd.s32 %s469, 1
      %s471 = scalar_select %p468, %s469, %s470
      %p474 = pneg %p468
      %p475 = scmp.eq.s32.totalorder %s29, 1
      %p476 = por %p474, %p475
      %p477 = scmp.ne.s32.totalorder %s469, %s472
      %p478 = scmp.eq.s32.totalorder %s29, 0
      %p479 = por %p477, %p478
      %p480 = scmp.ne.s32.totalorder %s469, %s472
      %p481 = scmp.eq.s32.totalorder %s34, 1
      %p482 = por %p480, %p481
      %p483 = scmp.ne.s32.totalorder %s472, %s473
      %p484 = scmp.eq.s32.totalorder %s34, 0
      %p485 = por %p483, %p484
      %p486 = scmp.ne.s32.totalorder %s472, %s473
      %p487 = scmp.eq.s32.totalorder %s35, 1
      %p488 = por %p486, %p487
      %p490 = scmp.ne.s32.totalorder %s473, %s489
      %p491 = scmp.eq.s32.totalorder %s35, 0
      %p492 = por %p490, %p491
      %p493 = scmp.le.s32.totalorder 1, %s29
      %p494 = scmp.lt.s32.totalorder %s29, 3
      %p495 = pnand %p493, %p494
      %p496 = pneg %p495
      // Predicated region
      $region9: #{tpu_custom_call.1} parent=5 // pred_check
        _
      $region10: #{tpu_custom_call.1} parent=5 // pred_check_branch
        %498 = sbr.rel (%p495) target = $region12
      $region11: #{tpu_custom_call.1} parent=5 // pred_region
        %s499 = ssub.s32 %s29, 1
        // Predicated region
        $region13: #{tpu_custom_call.1} parent=11 // pred_check
          %p500 = pneg %p102
        $region14: #{tpu_custom_call.1} parent=11 // pred_check_branch
          %502 = sbr.rel (%p500) target = $region16
        $region15: #{tpu_custom_call.1} parent=11 // pred_region
          _
        $region16: #{tpu_custom_call.1} parent=11 // pred_fallthru
          _
        // Predicated region
        $region17: #{tpu_custom_call.1} parent=11 // pred_check
          %p503 = pneg %p123
        $region18: #{tpu_custom_call.1} parent=11 // pred_check_branch
          %505 = sbr.rel (%p503) target = $region20
        $region19: #{tpu_custom_call.1} parent=11 // pred_region
          _
        $region20: #{tpu_custom_call.1} parent=11 // pred_fallthru
          _
        // Predicated region
        $region21: #{tpu_custom_call.1} parent=11 // pred_check
          %p506 = pneg %p144
        $region22: #{tpu_custom_call.1} parent=11 // pred_check_branch
          %508 = sbr.rel (%p506) target = $region24
        $region23: #{tpu_custom_call.1} parent=11 // pred_region
          _
        $region24: #{tpu_custom_call.1} parent=11 // pred_fallthru
          _
        // Predicated region
        $region25: #{tpu_custom_call.1} parent=11 // pred_check
          %p509 = pneg %p165
        $region26: #{tpu_custom_call.1} parent=11 // pred_check_branch
          %511 = sbr.rel (%p509) target = $region28
        $region27: #{tpu_custom_call.1} parent=11 // pred_region
          _
        $region28: #{tpu_custom_call.1} parent=11 // pred_fallthru
          _
        // Predicated region
        $region29: #{tpu_custom_call.1} parent=11 // pred_check
          %p512 = pneg %p186
        $region30: #{tpu_custom_call.1} parent=11 // pred_check_branch
          %514 = sbr.rel (%p512) target = $region32
        $region31: #{tpu_custom_call.1} parent=11 // pred_region
          _
        $region32: #{tpu_custom_call.1} parent=11 // pred_fallthru
          _
        // Predicated region
        $region33: #{tpu_custom_call.1} parent=11 // pred_check
          %p515 = pneg %p207
        $region34: #{tpu_custom_call.1} parent=11 // pred_check_branch
          %517 = sbr.rel (%p515) target = $region36
        $region35: #{tpu_custom_call.1} parent=11 // pred_region
          _
        $region36: #{tpu_custom_call.1} parent=11 // pred_fallthru
          _
        // Predicated region
        $region37: #{tpu_custom_call.1} parent=11 // pred_check
          %p518 = pneg %p228
        $region38: #{tpu_custom_call.1} parent=11 // pred_check_branch
          %520 = sbr.rel (%p518) target = $region40
        $region39: #{tpu_custom_call.1} parent=11 // pred_region
          _
        $region40: #{tpu_custom_call.1} parent=11 // pred_fallthru
          _
        // Predicated region
        $region41: #{tpu_custom_call.1} parent=11 // pred_check
          %p521 = pneg %p249
        $region42: #{tpu_custom_call.1} parent=11 // pred_check_branch
          %523 = sbr.rel (%p521) target = $region44
        $region43: #{tpu_custom_call.1} parent=11 // pred_region
          _
        $region44: #{tpu_custom_call.1} parent=11 // pred_fallthru
          _
        // Predicated region
        $region45: #{tpu_custom_call.1} parent=11 // pred_check
          %p524 = pneg %p270
        $region46: #{tpu_custom_call.1} parent=11 // pred_check_branch
          %526 = sbr.rel (%p524) target = $region48
        $region47: #{tpu_custom_call.1} parent=11 // pred_region
          _
        $region48: #{tpu_custom_call.1} parent=11 // pred_fallthru
          _
        // Predicated region
        $region49: #{tpu_custom_call.1} parent=11 // pred_check
          %p527 = pneg %p291
        $region50: #{tpu_custom_call.1} parent=11 // pred_check_branch
          %529 = sbr.rel (%p527) target = $region52
        $region51: #{tpu_custom_call.1} parent=11 // pred_region
          _
        $region52: #{tpu_custom_call.1} parent=11 // pred_fallthru
          _
        // Predicated region
        $region53: #{tpu_custom_call.1} parent=11 // pred_check
          %p530 = pneg %p312
        $region54: #{tpu_custom_call.1} parent=11 // pred_check_branch
          %532 = sbr.rel (%p530) target = $region56
        $region55: #{tpu_custom_call.1} parent=11 // pred_region
          _
        $region56: #{tpu_custom_call.1} parent=11 // pred_fallthru
          _
        // Predicated region
        $region57: #{tpu_custom_call.1} parent=11 // pred_check
          %p533 = pneg %p333
        $region58: #{tpu_custom_call.1} parent=11 // pred_check_branch
          %535 = sbr.rel (%p533) target = $region60
        $region59: #{tpu_custom_call.1} parent=11 // pred_region
          _
        $region60: #{tpu_custom_call.1} parent=11 // pred_fallthru
          _
        // Predicated region
        $region61: #{tpu_custom_call.1} parent=11 // pred_check
          %p536 = pneg %p354
        $region62: #{tpu_custom_call.1} parent=11 // pred_check_branch
          %538 = sbr.rel (%p536) target = $region64
        $region63: #{tpu_custom_call.1} parent=11 // pred_region
          _
        $region64: #{tpu_custom_call.1} parent=11 // pred_fallthru
          _
        // Predicated region
        $region65: #{tpu_custom_call.1} parent=11 // pred_check
          %p539 = pneg %p375
        $region66: #{tpu_custom_call.1} parent=11 // pred_check_branch
          %541 = sbr.rel (%p539) target = $region68
        $region67: #{tpu_custom_call.1} parent=11 // pred_region
          _
        $region68: #{tpu_custom_call.1} parent=11 // pred_fallthru
          _
        // Predicated region
        $region69: #{tpu_custom_call.1} parent=11 // pred_check
          %p542 = pneg %p396
        $region70: #{tpu_custom_call.1} parent=11 // pred_check_branch
          %544 = sbr.rel (%p542) target = $region72
        $region71: #{tpu_custom_call.1} parent=11 // pred_region
          _
        $region72: #{tpu_custom_call.1} parent=11 // pred_fallthru
          _
        // Predicated region
        $region73: #{tpu_custom_call.1} parent=11 // pred_check
          %p545 = pneg %p417
        $region74: #{tpu_custom_call.1} parent=11 // pred_check_branch
          %547 = sbr.rel (%p545) target = $region76
        $region75: #{tpu_custom_call.1} parent=11 // pred_region
          _
        $region76: #{tpu_custom_call.1} parent=11 // pred_fallthru
          _
        // Predicated region
        $region77: #{tpu_custom_call.1} parent=11 // pred_check
          %p548 = pneg %p438
        $region78: #{tpu_custom_call.1} parent=11 // pred_check_branch
          %550 = sbr.rel (%p548) target = $region80
        $region79: #{tpu_custom_call.1} parent=11 // pred_region
          _
        $region80: #{tpu_custom_call.1} parent=11 // pred_fallthru
          _
        // Predicated region
        $region81: #{tpu_custom_call.1} parent=11 // pred_check
          %p551 = pneg %p459
        $region82: #{tpu_custom_call.1} parent=11 // pred_check_branch
          %553 = sbr.rel (%p551) target = $region84
        $region83: #{tpu_custom_call.1} parent=11 // pred_region
          _
        $region84: #{tpu_custom_call.1} parent=11 // pred_fallthru
          _
      $region12: #{tpu_custom_call.1} parent=5 // pred_fallthru
        _
      %p554 = scmp.lt.s32.totalorder %s29, 2
      // Predicated region
      $region85: #{tpu_custom_call.1} parent=5 // pred_check
        %p555 = pneg %p554
      $region86: #{tpu_custom_call.1} parent=5 // pred_check_branch
        %557 = sbr.rel (%p555) target = $region88
      $region87: #{tpu_custom_call.1} parent=5 // pred_region
        // Predicated region
        $region89: #{tpu_custom_call.1} parent=87 // pred_check
          %p558 = pneg %p49
        $region90: #{tpu_custom_call.1} parent=87 // pred_check_branch
          %560 = sbr.rel (%p558) target = $region92
        $region91: #{tpu_custom_call.1} parent=87 // pred_region
          %p561 = scmp.lt.s32.totalorder %s29, 1
          %s562 = scalar_select %p561, %s29, 1
          %s563 = smul.addr %s562, 8
          %s564 = scalar_lea.vmem %s0, %s563
        $region92: #{tpu_custom_call.1} parent=87 // pred_fallthru
          _
        // Predicated region
        $region93: #{tpu_custom_call.1} parent=87 // pred_check
          %p565 = pneg %p75
        $region94: #{tpu_custom_call.1} parent=87 // pred_check_branch
          %567 = sbr.rel (%p565) target = $region96
        $region95: #{tpu_custom_call.1} parent=87 // pred_region
          %p568 = scmp.lt.s32.totalorder %s29, 1
          %s569 = scalar_select %p568, %s29, 1
          %s570 = smul.addr %s569, 8
          %s571 = scalar_lea.vmem %s1, %s570
        $region96: #{tpu_custom_call.1} parent=87 // pred_fallthru
          _
      $region88: #{tpu_custom_call.1} parent=5 // pred_fallthru
        _
      %p572 = scmp.le.s32.totalorder 1, %s29
      %p573 = scmp.lt.s32.totalorder %s29, 3
      %p574 = pnand %p572, %p573
      %p575 = pneg %p574
      // Predicated region
      $region97: #{tpu_custom_call.1} parent=5 // pred_check
        _
      $region98: #{tpu_custom_call.1} parent=5 // pred_check_branch
        %577 = sbr.rel (%p574) target = $region100
      $region99: #{tpu_custom_call.1} parent=5 // pred_region
        %s578 = ssub.s32 %s29, 1
        %p579 = scmp.lt.s32.totalorder %s34, 1
        %s580 = scalar_select %p579, %s34, 1
        %s581 = smul.addr %s580, 8
        %s582 = scalar_lea.vmem %s0, %s581
        %p583 = pneg %p55
        %p584 = pneg %p52
        %p585 = scmp.lt.s32.totalorder %s34, 1
        %s586 = scalar_select %p585, %s34, 1
        %s587 = smul.addr %s586, 8
        %s588 = scalar_lea.vmem %s1, %s587
        %p589 = pneg %p81
        %p590 = pneg %p78
        %p591 = pneg %p102
        %p592 = pneg %p99
        %p593 = pneg %p123
        %p594 = pneg %p120
        %p595 = pneg %p144
        %p596 = pneg %p141
        %p597 = pneg %p165
        %p598 = pneg %p162
        %p599 = pneg %p186
        %p600 = pneg %p183
        %p601 = pneg %p207
        %p602 = pneg %p204
        %p603 = pneg %p228
        %p604 = pneg %p225
        %p605 = pneg %p249
        %p606 = pneg %p246
        %p607 = pneg %p270
        %p608 = pneg %p267
        %p609 = pneg %p291
        %p610 = pneg %p288
        %p611 = pneg %p312
        %p612 = pneg %p309
        %p613 = pneg %p333
        %p614 = pneg %p330
        %p615 = pneg %p354
        %p616 = pneg %p351
        %p617 = pneg %p375
        %p618 = pneg %p372
        %p619 = pneg %p396
        %p620 = pneg %p393
        %p621 = pneg %p417
        %p622 = pneg %p414
        %p623 = pneg %p438
        %p624 = pneg %p435
        %p625 = pneg %p459
        %p626 = pneg %p456
        %p627 = pneg %p485
        %p628 = pneg %p482
        %s629 = sand.u32 %s472, 1
        %s630 = scalar_lea.sflag [#allocation3], %s629
        %s631 = sand.u32 %s472, 1
        %s632 = smul.addr %s631, 8
        %s633 = scalar_lea.vmem [#allocation2], %s632
        %p634 = scmp.lt.s32.totalorder %s34, 1
        %s635 = scalar_select %p634, %s34, 1
        %s636 = smul.addr %s635, 8
        %s637 = scalar_lea.vmem %s0, %s636
        %p638 = scmp.lt.s32.totalorder %s34, 1
        %s639 = scalar_select %p638, %s34, 1
        %s640 = smul.addr %s639, 8
        %s641 = scalar_lea.vmem %s1, %s640
        %v642 = vld [vmem:[%s637] sm:$0xff]
        %v643 = vld [vmem:[%s2] sm:$0xff]
        %v644 = vld [vmem:[%s3] sm:$0xff]
        %vm645 = vcmask 64512
        %v647 = vsel %vm645, %v643, 0
        %649 = vmatpush.msra.mxu0 0.0
        %650 = vmatpush.msra.mxu0 0.0
        %651 = vmatpush.msra.mxu0 0.0
        %652 = vmatpush.msra.mxu0 0.0
        %653 = vmatpush.msra.mxu0 0.0
        %654 = vmatpush.msra.mxu0 0.0
        %655 = vmatpush.msra.mxu0 0.0
        %656 = vmatpush.msra.mxu0 0.0
        %657 = vmatpush.msra.mxu0 0.0
        %658 = vmatpush.msra.mxu0 0.0
        %659 = vmatpush.msra.mxu0 0.0
        %660 = vmatpush.msra.mxu0 0.0
        %661 = vmatpush.msra.mxu0 0.0
        %662 = vmatpush.msra.mxu0 0.0
        %663 = vmatpush.msra.mxu0 0.0
        %664 = vmatpush.msra.mxu0 %v642
        %665 = vmatmul.f32.gmra.mxu0 %v647
        %v666 = vpop.f32.mrf.mxu0
        %v667 = vadd.f32 0.0, %v666
        %668 = vdwg.mxu0
        %v670 = vsel %vm645, %v644, 0
        %672 = vmatpush.msra.mxu0 0.0
        %673 = vmatpush.msra.mxu0 0.0
        %674 = vmatpush.msra.mxu0 0.0
        %675 = vmatpush.msra.mxu0 0.0
        %676 = vmatpush.msra.mxu0 0.0
        %677 = vmatpush.msra.mxu0 0.0
        %678 = vmatpush.msra.mxu0 0.0
        %679 = vmatpush.msra.mxu0 0.0
        %680 = vmatpush.msra.mxu0 0.0
        %681 = vmatpush.msra.mxu0 0.0
        %682 = vmatpush.msra.mxu0 0.0
        %683 = vmatpush.msra.mxu0 0.0
        %684 = vmatpush.msra.mxu0 0.0
        %685 = vmatpush.msra.mxu0 0.0
        %686 = vmatpush.msra.mxu0 0.0
        %687 = vmatpush.msra.mxu0 %v667
        %688 = vmatmul.f32.gmra.mxu0 %v670
        %v689 = vpop.f32.mrf.mxu0
        %v690 = vadd.f32 0.0, %v689
        %691 = vdwg.mxu0
        %v692 = vld [vmem:[%s4] sm:$0x1]
        %v694 = vperm.slane %v692, 0
        %v696 = vmul.f32 %v694, %v642
        %v697 = vld [vmem:[%s5] sm:$0x1]
        %v699 = vperm.slane %v697, 0
        %v701 = vmul.f32 %v699, %v690
        %v702 = vadd.f32 %v696, %v701
        %v703 = vld [vmem:[%s6] sm:$0x1]
        %v704 = vld [vmem:[%s7] sm:$0x1]
        %vm705 = vcmask 261120
        %v706 = vsel %vm705, %v702, 0.0
        %707 = vadd.xlane.f32.xlu0 %v706
        %v708 = vpop.xlane.xlu0 %707
        %v709 = vrcp.pop 32.0
        %v710 = vmul.f32 32.0, %v709
        %v711 = vsub.f32 1.0, %v710
        %v712 = vmul.f32 %v709, %v711
        %v713 = vadd.f32 %v709, %v712
        %vm714 = vweird.f32 %v709
        %v715 = vsel %vm714, %v709, %v713
        %v716 = vmul.f32 %v708, %v715
        %v717 = vsub.f32 %v702, %v716
        %v718 = vmul.f32 %v717, %v717
        %v719 = vsel %vm705, %v718, 0.0
        %720 = vadd.xlane.f32.xlu0 %v719
        %v721 = vpop.xlane.xlu0 %720
        %v722 = vmul.f32 %v721, %v715
        %v723 = vadd.f32 %v722, 1e-12
        %v724 = vrsqrt.pop %v723
        %v725 = vmul.f32 %v724, %v723
        %v726 = vmul.f32 %v725, %v724
        %v727 = vmul.f32 0.5, %v726
        %v728 = vsub.f32 1.5, %v727
        %v729 = vmul.f32 %v724, %v728
        %vm730 = vweird.f32 %v723
        %vm731 = vweird.f32 %v724
        %vm732 = vmor %vm730, %vm731
        %v733 = vsel %vm732, %v724, %v729
        %v734 = vmul.f32 %v717, %v733
        %v736 = vperm.slane %v703, 0
        %v738 = vmul.f32 %v736, %v734
        %v740 = vperm.slane %v704, 0
        %v742 = vadd.f32 %v738, %v740
        %v743 = vld [vmem:[%s8] sm:$0xff]
        %v744 = vld [vmem:[%s8 + $0x8] sm:$0xff]
        %v745 = vld [vmem:[%s8 + $0x10] sm:$0xff]
        %v746 = vld [vmem:[%s8 + $0x18] sm:$0xff]
        %v747 = vld [vmem:[%s9] sm:$0x1]
        %v749 = vperm.slane %v747, 0
        %v752 = vsel %vm705, %v642, 0
        %754 = vmatpush.msra.mxu0 0.0
        %755 = vmatpush.msra.mxu0 0.0
        %756 = vmatpush.msra.mxu0 0.0
        %757 = vmatpush.msra.mxu0 0.0
        %758 = vmatpush.msra.mxu0 0.0
        %759 = vmatpush.msra.mxu0 0.0
        %760 = vmatpush.msra.mxu0 0.0
        %761 = vmatpush.msra.mxu0 0.0
        %762 = vmatpush.msra.mxu0 0.0
        %763 = vmatpush.msra.mxu0 0.0
        %764 = vmatpush.msra.mxu0 0.0
        %765 = vmatpush.msra.mxu0 0.0
        %766 = vmatpush.msra.mxu0 %v746
        %767 = vmatpush.msra.mxu0 %v745
        %768 = vmatpush.msra.mxu0 %v744
        %769 = vmatpush.msra.mxu0 %v743
        %770 = vmatmul.f32.gmra.mxu0 %v752
        %v771 = vpop.f32.mrf.mxu0
        %v772 = vadd.f32 %v749, %v771
        %773 = vdwg.mxu0
        %v774 = vld [vmem:[%s641] sm:$0xff]
        %776 = vrot.lane.b32.xlu0 %v772, 96
        %v777 = vpop.permute.xlu0 %776
        %vm778 = vcmask 130048
        %v779 = vsel %vm778, %v772, 0
        %v781 = vsel %vm778, %v777, 0
        %783 = vmatpush.xpose.msra.mxu0 0.0
        %784 = vmatpush.xpose.msra.mxu0 0.0
        %785 = vmatpush.xpose.msra.mxu0 0.0
        %786 = vmatpush.xpose.msra.mxu0 0.0
        %787 = vmatpush.xpose.msra.mxu0 0.0
        %788 = vmatpush.xpose.msra.mxu0 0.0
        %789 = vmatpush.xpose.msra.mxu0 0.0
        %790 = vmatpush.xpose.msra.mxu0 0.0
        %791 = vmatpush.xpose.msra.mxu0 0.0
        %792 = vmatpush.xpose.msra.mxu0 0.0
        %793 = vmatpush.xpose.msra.mxu0 0.0
        %794 = vmatpush.xpose.msra.mxu0 0.0
        %795 = vmatpush.xpose.msra.mxu0 0.0
        %796 = vmatpush.xpose.msra.mxu0 0.0
        %797 = vmatpush.xpose.msra.mxu0 0.0
        %798 = vmatpush.xpose.msra.mxu0 %v781
        %799 = vmatmul.f32.gmra.mxu0 %v779
        %v800 = vpop.f32.mrf.mxu0
        %v801 = vadd.f32 0.0, %v800
        %802 = vdwg.mxu0
        %v803 = vmul.f32 %v801, 0.25
        %v804 = vadd.f32 %v803, %v774
        %v805 = vsel %vm645, %v804, -inf
        %806 = vmax.xlane.f32.xlu0 %v805
        %v807 = vpop.xlane.xlu0 %806
        %v808 = vsub.f32 %v804, %v807
        %v809 = vmul.f32 %v808, 1.442695
        %v810 = vpow.pop %v809
        %v811 = vsel %vm645, %v810, 0.0
        %812 = vadd.xlane.f32.xlu0 %v811
        %v813 = vpop.xlane.xlu0 %812
        %v814 = vrcp.pop %v813
        %v815 = vmul.f32 %v813, %v814
        %v816 = vsub.f32 1.0, %v815
        %v817 = vmul.f32 %v814, %v816
        %v818 = vadd.f32 %v814, %v817
        %vm819 = vweird.f32 %v813
        %vm820 = vweird.f32 %v814
        %vm821 = vmor %vm819, %vm820
        %v822 = vsel %vm821, %v814, %v818
        %v823 = vand.u32 2147483647, %v813
        %vm824 = vcmp.eq.f32.partialorder %v823, 8.507059e+37
        %v825 = vand.u32 %v813, 2147483648
        %v826 = vor.u32 1.1754944e-38, %v825
        %v827 = vsel %vm824, %v826, %v822
        %v828 = vmul.f32 %v810, %v827
        %829 = vrot.lane.b32.xlu0 %v772, 64
        %v830 = vpop.permute.xlu0 %829
        %v833 = vsel %vm645, %v828, 0
        %835 = vmatpush.msra.mxu0 0.0
        %836 = vmatpush.msra.mxu0 0.0
        %837 = vmatpush.msra.mxu0 0.0
        %838 = vmatpush.msra.mxu0 0.0
        %839 = vmatpush.msra.mxu0 0.0
        %840 = vmatpush.msra.mxu0 0.0
        %841 = vmatpush.msra.mxu0 0.0
        %842 = vmatpush.msra.mxu0 0.0
        %843 = vmatpush.msra.mxu0 0.0
        %844 = vmatpush.msra.mxu0 0.0
        %845 = vmatpush.msra.mxu0 0.0
        %846 = vmatpush.msra.mxu0 0.0
        %847 = vmatpush.msra.mxu0 0.0
        %848 = vmatpush.msra.mxu0 0.0
        %849 = vmatpush.msra.mxu0 0.0
        %850 = vmatpush.msra.mxu0 %v830
        %851 = vmatmul.f32.gmra.mxu0 %v833
        %v852 = vpop.f32.mrf.mxu0
        %v853 = vadd.f32 0.0, %v852
        %854 = vdwg.mxu0
        %855 = vrot.lane.b32.xlu0 %v772, 112
        %v856 = vpop.permute.xlu0 %855
        %857 = vrot.lane.b32.xlu0 %v772, 80
        %v858 = vpop.permute.xlu0 %857
        %v859 = vsel %vm778, %v856, 0
        %v861 = vsel %vm778, %v858, 0
        %863 = vmatpush.xpose.msra.mxu0 0.0
        %864 = vmatpush.xpose.msra.mxu0 0.0
        %865 = vmatpush.xpose.msra.mxu0 0.0
        %866 = vmatpush.xpose.msra.mxu0 0.0
        %867 = vmatpush.xpose.msra.mxu0 0.0
        %868 = vmatpush.xpose.msra.mxu0 0.0
        %869 = vmatpush.xpose.msra.mxu0 0.0
        %870 = vmatpush.xpose.msra.mxu0 0.0
        %871 = vmatpush.xpose.msra.mxu0 0.0
        %872 = vmatpush.xpose.msra.mxu0 0.0
        %873 = vmatpush.xpose.msra.mxu0 0.0
        %874 = vmatpush.xpose.msra.mxu0 0.0
        %875 = vmatpush.xpose.msra.mxu0 0.0
        %876 = vmatpush.xpose.msra.mxu0 0.0
        %877 = vmatpush.xpose.msra.mxu0 0.0
        %878 = vmatpush.xpose.msra.mxu0 %v861
        %879 = vmatmul.f32.gmra.mxu0 %v859
        %v880 = vpop.f32.mrf.mxu0
        %v881 = vadd.f32 0.0, %v880
        %882 = vdwg.mxu0
        %v883 = vmul.f32 %v881, 0.25
        %v884 = vadd.f32 %v883, %v774
        %v885 = vsel %vm645, %v884, -inf
        %886 = vmax.xlane.f32.xlu0 %v885
        %v887 = vpop.xlane.xlu0 %886
        %v888 = vsub.f32 %v884, %v887
        %v889 = vmul.f32 %v888, 1.442695
        %v890 = vpow.pop %v889
        %v891 = vsel %vm645, %v890, 0.0
        %892 = vadd.xlane.f32.xlu0 %v891
        %v893 = vpop.xlane.xlu0 %892
        %v894 = vrcp.pop %v893
        %v895 = vmul.f32 %v893, %v894
        %v896 = vsub.f32 1.0, %v895
        %v897 = vmul.f32 %v894, %v896
        %v898 = vadd.f32 %v894, %v897
        %vm899 = vweird.f32 %v893
        %vm900 = vweird.f32 %v894
        %vm901 = vmor %vm899, %vm900
        %v902 = vsel %vm901, %v894, %v898
        %v903 = vand.u32 2147483647, %v893
        %vm904 = vcmp.eq.f32.partialorder %v903, 8.507059e+37
        %v905 = vand.u32 %v893, 2147483648
        %v906 = vor.u32 1.1754944e-38, %v905
        %v907 = vsel %vm904, %v906, %v902
        %v908 = vmul.f32 %v890, %v907
        %909 = vrot.lane.b32.xlu0 %v772, 48
        %v910 = vpop.permute.xlu0 %909
        %v913 = vsel %vm645, %v908, 0
        %915 = vmatpush.msra.mxu0 0.0
        %916 = vmatpush.msra.mxu0 0.0
        %917 = vmatpush.msra.mxu0 0.0
        %918 = vmatpush.msra.mxu0 0.0
        %919 = vmatpush.msra.mxu0 0.0
        %920 = vmatpush.msra.mxu0 0.0
        %921 = vmatpush.msra.mxu0 0.0
        %922 = vmatpush.msra.mxu0 0.0
        %923 = vmatpush.msra.mxu0 0.0
        %924 = vmatpush.msra.mxu0 0.0
        %925 = vmatpush.msra.mxu0 0.0
        %926 = vmatpush.msra.mxu0 0.0
        %927 = vmatpush.msra.mxu0 0.0
        %928 = vmatpush.msra.mxu0 0.0
        %929 = vmatpush.msra.mxu0 0.0
        %930 = vmatpush.msra.mxu0 %v910
        %931 = vmatmul.f32.gmra.mxu0 %v913
        %v932 = vpop.f32.mrf.mxu0
        %v933 = vadd.f32 0.0, %v932
        %934 = vdwg.mxu0
        %936 = vrot.lane.b32.xlu0 %v933, 16
        %v937 = vpop.permute.xlu0 %936
        %v939 = vsel %vm778, %v853, %v937
        %v940 = vld [vmem:[%s10] sm:$0xff]
        %v941 = vld [vmem:[%s10 + $0x8] sm:$0xff]
        %v942 = vld [vmem:[%s10 + $0x10] sm:$0xff]
        %v943 = vld [vmem:[%s10 + $0x18] sm:$0xff]
        %v944 = vld [vmem:[%s11] sm:$0x1]
        %v946 = vperm.slane %v944, 0
        %v949 = vsel %vm705, %v939, 0
        %951 = vmatpush.msra.mxu0 0.0
        %952 = vmatpush.msra.mxu0 0.0
        %953 = vmatpush.msra.mxu0 0.0
        %954 = vmatpush.msra.mxu0 0.0
        %955 = vmatpush.msra.mxu0 0.0
        %956 = vmatpush.msra.mxu0 0.0
        %957 = vmatpush.msra.mxu0 0.0
        %958 = vmatpush.msra.mxu0 0.0
        %959 = vmatpush.msra.mxu0 0.0
        %960 = vmatpush.msra.mxu0 0.0
        %961 = vmatpush.msra.mxu0 0.0
        %962 = vmatpush.msra.mxu0 0.0
        %963 = vmatpush.msra.mxu0 %v943
        %964 = vmatpush.msra.mxu0 %v942
        %965 = vmatpush.msra.mxu0 %v941
        %966 = vmatpush.msra.mxu0 %v940
        %967 = vmatmul.f32.gmra.mxu0 %v949
        %v968 = vpop.f32.mrf.mxu0
        %v969 = vadd.f32 %v946, %v968
        %970 = vdwg.mxu0
        %v971 = vadd.f32 %v969, %v642
        %v972 = vld [vmem:[%s12] sm:$0x1]
        %v973 = vld [vmem:[%s13] sm:$0x1]
        %v974 = vsel %vm705, %v971, 0.0
        %975 = vadd.xlane.f32.xlu0 %v974
        %v976 = vpop.xlane.xlu0 %975
        %v977 = vmul.f32 %v976, %v715
        %v978 = vsub.f32 %v971, %v977
        %v979 = vmul.f32 %v978, %v978
        %v980 = vsel %vm705, %v979, 0.0
        %981 = vadd.xlane.f32.xlu0 %v980
        %v982 = vpop.xlane.xlu0 %981
        %v983 = vmul.f32 %v982, %v715
        %v984 = vadd.f32 %v983, 1e-12
        %v985 = vrsqrt.pop %v984
        %v986 = vmul.f32 %v985, %v984
        %v987 = vmul.f32 %v986, %v985
        %v988 = vmul.f32 0.5, %v987
        %v989 = vsub.f32 1.5, %v988
        %v990 = vmul.f32 %v985, %v989
        %vm991 = vweird.f32 %v984
        %vm992 = vweird.f32 %v985
        %vm993 = vmor %vm991, %vm992
        %v994 = vsel %vm993, %v985, %v990
        %v995 = vmul.f32 %v978, %v994
        %v997 = vperm.slane %v972, 0
        %v999 = vmul.f32 %v997, %v995
        %v1001 = vperm.slane %v973, 0
        %v1003 = vadd.f32 %v999, %v1001
        %v1004 = vmul.f32 %v742, 0.7
        %v1005 = vmul.f32 %v1003, 0.3
        %v1006 = vadd.f32 %v1004, %v1005
        %v1007 = vld [vmem:[%s14] sm:$0xff]
        %v1008 = vld [vmem:[%s14 + $0x8] sm:$0xff]
        %v1009 = vld [vmem:[%s14 + $0x10] sm:$0xff]
        %v1010 = vld [vmem:[%s14 + $0x18] sm:$0xff]
        %v1011 = vld [vmem:[%s15] sm:$0x1]
        %v1013 = vperm.slane %v1011, 0
        %v1016 = vsel %vm705, %v1006, 0
        %1018 = vmatpush.msra.mxu0 0.0
        %1019 = vmatpush.msra.mxu0 0.0
        %1020 = vmatpush.msra.mxu0 0.0
        %1021 = vmatpush.msra.mxu0 0.0
        %1022 = vmatpush.msra.mxu0 0.0
        %1023 = vmatpush.msra.mxu0 0.0
        %1024 = vmatpush.msra.mxu0 0.0
        %1025 = vmatpush.msra.mxu0 0.0
        %1026 = vmatpush.msra.mxu0 0.0
        %1027 = vmatpush.msra.mxu0 0.0
        %1028 = vmatpush.msra.mxu0 0.0
        %1029 = vmatpush.msra.mxu0 0.0
        %1030 = vmatpush.msra.mxu0 %v1010
        %1031 = vmatpush.msra.mxu0 %v1009
        %1032 = vmatpush.msra.mxu0 %v1008
        %1033 = vmatpush.msra.mxu0 %v1007
        %1034 = vmatmul.f32.gmra.mxu0 %v1016
        %v1035 = vpop.f32.mrf.mxu0
        %v1036 = vadd.f32 %v1013, %v1035
        %1037 = vdwg.mxu0
        %v1038 = vmax.f32 %v1036, 0.0
        %v1039 = vld [vmem:[%s16] sm:$0xff]
        %v1040 = vld [vmem:[%s16 + $0x8] sm:$0xff]
        %v1041 = vld [vmem:[%s16 + $0x10] sm:$0xff]
        %v1042 = vld [vmem:[%s16 + $0x18] sm:$0xff]
        %v1043 = vld [vmem:[%s16 + $0x20] sm:$0xff]
        %v1044 = vld [vmem:[%s16 + $0x28] sm:$0xff]
        %v1045 = vld [vmem:[%s16 + $0x30] sm:$0xff]
        %v1046 = vld [vmem:[%s16 + $0x38] sm:$0xff]
        %v1047 = vld [vmem:[%s16 + $0x40] sm:$0xff]
        %v1048 = vld [vmem:[%s16 + $0x48] sm:$0xff]
        %v1049 = vld [vmem:[%s16 + $0x50] sm:$0xff]
        %v1050 = vld [vmem:[%s16 + $0x58] sm:$0xff]
        %v1051 = vld [vmem:[%s16 + $0x60] sm:$0xff]
        %v1052 = vld [vmem:[%s16 + $0x68] sm:$0xff]
        %v1053 = vld [vmem:[%s16 + $0x70] sm:$0xff]
        %v1054 = vld [vmem:[%s16 + $0x78] sm:$0xff]
        %v1055 = vld [vmem:[%s17] sm:$0x1]
        %v1057 = vperm.slane %v1055, 0
        %1059 = vmatpush.msra.mxu0 %v1054
        %1060 = vmatpush.msra.mxu0 %v1053
        %1061 = vmatpush.msra.mxu0 %v1052
        %1062 = vmatpush.msra.mxu0 %v1051
        %1063 = vmatpush.msra.mxu0 %v1050
        %1064 = vmatpush.msra.mxu0 %v1049
        %1065 = vmatpush.msra.mxu0 %v1048
        %1066 = vmatpush.msra.mxu0 %v1047
        %1067 = vmatpush.msra.mxu0 %v1046
        %1068 = vmatpush.msra.mxu0 %v1045
        %1069 = vmatpush.msra.mxu0 %v1044
        %1070 = vmatpush.msra.mxu0 %v1043
        %1071 = vmatpush.msra.mxu0 %v1042
        %1072 = vmatpush.msra.mxu0 %v1041
        %1073 = vmatpush.msra.mxu0 %v1040
        %1074 = vmatpush.msra.mxu0 %v1039
        %1075 = vmatmul.f32.gmra.mxu0 %v1038
        %v1076 = vpop.f32.mrf.mxu0
        %v1077 = vadd.f32 %v1057, %v1076
        %1078 = vdwg.mxu0
        %v1079 = vadd.f32 %v1077, %v1006
        %v1080 = vld [vmem:[%s18] sm:$0x1]
        %v1081 = vld [vmem:[%s19] sm:$0x1]
        %v1082 = vsel %vm705, %v1079, 0.0
        %1083 = vadd.xlane.f32.xlu0 %v1082
        %v1084 = vpop.xlane.xlu0 %1083
        %v1085 = vmul.f32 %v1084, %v715
        %v1086 = vsub.f32 %v1079, %v1085
        %v1087 = vmul.f32 %v1086, %v1086
        %v1088 = vsel %vm705, %v1087, 0.0
        %1089 = vadd.xlane.f32.xlu0 %v1088
        %v1090 = vpop.xlane.xlu0 %1089
        %v1091 = vmul.f32 %v1090, %v715
        %v1092 = vadd.f32 %v1091, 1e-12
        %v1093 = vrsqrt.pop %v1092
        %v1094 = vmul.f32 %v1093, %v1092
        %v1095 = vmul.f32 %v1094, %v1093
        %v1096 = vmul.f32 0.5, %v1095
        %v1097 = vsub.f32 1.5, %v1096
        %v1098 = vmul.f32 %v1093, %v1097
        %vm1099 = vweird.f32 %v1092
        %vm1100 = vweird.f32 %v1093
        %vm1101 = vmor %vm1099, %vm1100
        %v1102 = vsel %vm1101, %v1093, %v1098
        %v1103 = vmul.f32 %v1086, %v1102
        %v1105 = vperm.slane %v1080, 0
        %v1107 = vmul.f32 %v1105, %v1103
        %v1109 = vperm.slane %v1081, 0
        %v1111 = vadd.f32 %v1107, %v1109
        %1112 = vst.msk [vmem:[%s633] sm:$0xff] %vm705, %v1111
        %s1113 = sand.u32 %s472, 1
        %s1114 = scalar_lea.sflag [#allocation3], %s1113
        %s1115 = sand.u32 %s472, 1
        %s1116 = smul.addr %s1115, 8
        %s1117 = scalar_lea.vmem [#allocation2], %s1116
        // Predicated region
        $region101: #{tpu_custom_call.1} parent=99 // pred_check
          %p1118 = pneg %p482
        $region102: #{tpu_custom_call.1} parent=99 // pred_check_branch
          %1120 = sbr.rel (%p1118) target = $region104
        $region103: #{tpu_custom_call.1} parent=99 // pred_region
          %1122 = vsyncadd %s1114, 0
          %s1123 = smul.addr %s34, 8
          %s1124 = scalar_lea.hbm %s20, %s1123
          %s1126 = sshll.u32 %s1117, 4
          %s1127 = int_to_ptr.vmem [resolvable:$true] %s1126
          %s1128 = sshll.u32 %s1124, 4
          %s1129 = int_to_ptr.hbm [resolvable:$true] %s1128
          %1131 = dma.vmem_to_hbm [thread:$0]  %s1127, 128, %s1129, %s1114
        $region104: #{tpu_custom_call.1} parent=99 // pred_fallthru
          _
      $region100: #{tpu_custom_call.1} parent=5 // pred_fallthru
        _
      %p1132 = scmp.le.s32.totalorder 2, %s29
      // Predicated region
      $region105: #{tpu_custom_call.1} parent=5 // pred_check
        %p1133 = pneg %p1132
      $region106: #{tpu_custom_call.1} parent=5 // pred_check_branch
        %1135 = sbr.rel (%p1133) target = $region108
      $region107: #{tpu_custom_call.1} parent=5 // pred_region
        %s1136 = ssub.s32 %s29, 2
        // Predicated region
        $region109: #{tpu_custom_call.1} parent=107 // pred_check
          %p1137 = pneg %p488
        $region110: #{tpu_custom_call.1} parent=107 // pred_check_branch
          %1139 = sbr.rel (%p1137) target = $region112
        $region111: #{tpu_custom_call.1} parent=107 // pred_region
          %s1140 = sand.u32 %s473, 1
          %s1141 = scalar_lea.sflag [#allocation3], %s1140
          %s1142 = sand.u32 %s473, 1
          %s1143 = smul.addr %s1142, 8
          %s1144 = scalar_lea.vmem [#allocation2], %s1143
          %1146 = dma.done %s1141, 128
        $region112: #{tpu_custom_call.1} parent=107 // pred_fallthru
          _
      $region108: #{tpu_custom_call.1} parent=5 // pred_fallthru
        _
    $region6: #{tpu_custom_call.1} parent=1 // loop_footer
      %s33 = sadd.s32 1, %s29
    $region7: #{tpu_custom_call.1} parent=1 // loop_footer_branch
      %28 = sbr.rel target = $region3
    $region8: #{tpu_custom_call.1} parent=1 // loop_exit
      _
    %1147 = vsyncpa [#allocation3], 1
    %s1148 = scalar_lea.sflag [#allocation3], 1
    %1149 = vsyncpa %s1148, 1

</llo_original>
